<compile_context>
chip_gen: v7x
topology: tpu7x:2x2x1
jax: 0.10.0
libtpu: 0.0.40
codegen_flags: <defaults>
</compile_context>

<pallas_src>
import functools

import numpy as np
import jax
import jax.numpy as jnp
from jax.experimental import pallas as pl
from jax.experimental.pallas import tpu as pltpu


# -----------------------------------------------------------------------------
# Weight-slab layout
# -----------------------------------------------------------------------------
def _align8(x):
    return ((x + 7) // 8) * 8


def make_offsets(E, R, A):
    """Row offsets of each parameter block inside the packed weight slab."""
    offs = {}
    cur = 0

    def take(name, nrows):
        nonlocal cur
        offs[name] = cur
        cur = _align8(cur + nrows)

    take('vis', 3 * R + E)   # fused visual-LSTM weight  [3R+E, 4R]
    take('lang', 3 * R)      # fused lang-LSTM weight    [3R,   4R]
    take('hatt', R)          # fused h_vis att. proj     [R,    4A]
    take('wv', R)            # [c_wv.T | p_wv.T | o_wv.T]  [R, 3A]
    take('vec', 5)           # 5 row vectors (biases + attention vectors)
    offs['rows'] = cur
    offs['lanes'] = max(4 * R, 4 * A)
    return offs


def pack_params(p, E, R, A):
    """Pack every weight/bias into one contiguous f32 slab (single resident DMA)."""
    offs = make_offsets(E, R, A)
    slab = np.zeros((offs['rows'], offs['lanes']), np.float32)

    def npT(x):
        return np.asarray(x).T

    # visual LSTM: rows ordered [h_lang_prev | fc | xt | h_vis_prev] (Whh folded in)
    w_vis = np.concatenate([npT(p['v_wih']), npT(p['v_whh'])], axis=0)       # [3R+E, 4R]
    # lang LSTM: rows ordered [output_feats | h_vis | h_lang_prev]
    w_lang = np.concatenate([npT(p['l_wih']), npT(p['l_whh'])], axis=0)      # [3R, 4R]
    # all four h_vis attention projections, side by side
    w_hatt = np.concatenate([npT(p['s_wh_w']), npT(p['c_wh_w']),
                             npT(p['p_wh_w']), npT(p['o_wh_w'])], axis=1)    # [R, 4A]
    b_hatt = np.concatenate([np.asarray(p['s_wh_b']), np.asarray(p['c_wh_b']),
                             np.asarray(p['p_wh_b']), np.asarray(p['o_wh_b'])])
    # feature projections c_wv / p_wv / o_wv, side by side
    w_wv = np.concatenate([npT(p['c_wv_w']), npT(p['p_wv_w']),
                           npT(p['o_wv_w'])], axis=1)                        # [R, 3A]
    b_wv = np.concatenate([np.asarray(p['c_wv_b']), np.asarray(p['p_wv_b']),
                           np.asarray(p['o_wv_b'])])
    # attention score vectors.  The (1,1) score biases *_wa_b cancel in every
    # softmax of the forward pass, so they are dropped from the kernel entirely.
    wa = np.concatenate([np.asarray(p['s_wa_w'])[0], np.asarray(p['c_wa_w'])[0],
                         np.asarray(p['p_wa_w'])[0], np.asarray(p['o_wa_w'])[0]])

    slab[offs['vis']:offs['vis'] + 3 * R + E, 0:4 * R] = w_vis
    slab[offs['lang']:offs['lang'] + 3 * R, 0:4 * R] = w_lang
    slab[offs['hatt']:offs['hatt'] + R, 0:4 * A] = w_hatt
    slab[offs['wv']:offs['wv'] + R, 0:3 * A] = w_wv
    v = offs['vec']
    slab[v + 0, 0:4 * R] = np.asarray(p['v_bih']) + np.asarray(p['v_bhh'])
    slab[v + 1, 0:4 * R] = np.asarray(p['l_bih']) + np.asarray(p['l_bhh'])
    slab[v + 2, 0:4 * A] = b_hatt
    slab[v + 3, 0:3 * A] = b_wv
    slab[v + 4, 0:4 * A] = wa
    return jnp.asarray(slab), offs


# -----------------------------------------------------------------------------
# Pallas kernel: one grid step == one decode step; weights/feats resident,
# state carried in VMEM scratch.
# -----------------------------------------------------------------------------
def cavp_core_kernel(w_ref, init_ref, feats_ref, xt_ref, out_ref, st_ref,
                     *, E, R, A, offs):
    f32 = jnp.float32
    t = pl.program_id(0)
    B = init_ref.shape[0]

    def mm(a, b):
        return jnp.dot(a, b, preferred_element_type=f32)

    # ---------- one-time state init (grid axis is sequential / "arbitrary") ----------
    @pl.when(t == 0)
    def _():
        st_ref[...] = init_ref[:, 0:4 * R]        # [h_vis | h_lang | c_vis | c_lang]

    # ---------- resident constants ----------
    fc = init_ref[:, 4 * R:5 * R]                 # [B, R]
    feats = feats_ref[...]                        # [B, N, 2R+3A] = [roi|ctx|proi|roi_pv|ctx_proj]
    roi = feats[:, :, 0:R]
    ctx = feats[:, :, R:2 * R]
    proi = feats[:, :, 2 * R:2 * R + A]
    roi_pv = feats[:, :, 2 * R + A:2 * R + 2 * A]        # roi @ p_wv (precomputed, const over T)
    ctx_proj = feats[:, :, 2 * R + 2 * A:2 * R + 3 * A]  # ctx @ c_wv + b (precomputed)

    xt = xt_ref[0]                                # [B, E]  (per-step tile)

    # ---------- previous state (VMEM scratch, carried across grid steps) ----------
    st = st_ref[...]
    h_vis_prev = st[:, 0:R]
    h_lang_prev = st[:, R:2 * R]
    c_vis_prev = st[:, 2 * R:3 * R]
    c_lang_prev = st[:, 3 * R:4 * R]

    # ---------- weight views (static slices of the resident slab) ----------
    v0 = offs['vis']
    W_hl = w_ref[v0:v0 + R, 0:4 * R]
    W_fc = w_ref[v0 + R:v0 + 2 * R, 0:4 * R]
    W_xt = w_ref[v0 + 2 * R:v0 + 2 * R + E, 0:4 * R]
    W_hv = w_ref[v0 + 2 * R + E:v0 + 3 * R + E, 0:4 * R]
    l0 = offs['lang']
    L_of = w_ref[l0:l0 + R, 0:4 * R]
    L_hv = w_ref[l0 + R:l0 + 2 * R, 0:4 * R]
    L_hl = w_ref[l0 + 2 * R:l0 + 3 * R, 0:4 * R]
    w_hatt = w_ref[offs['hatt']:offs['hatt'] + R, 0:4 * A]
    wv0 = offs['wv']
    p_wv = w_ref[wv0:wv0 + R, A:2 * A]
    o_wv = w_ref[wv0:wv0 + R, 2 * A:3 * A]
    vecs = w_ref[offs['vec']:offs['vec'] + 5, :]
    b_vis = vecs[0:1, 0:4 * R]
    b_lang = vecs[1:2, 0:4 * R]
    b_hatt = vecs[2:3, 0:4 * A]
    p_wvb = vecs[3:4, A:2 * A]
    o_wvb = vecs[3:4, 2 * A:3 * A]
    s_wa = vecs[4:5, 0:A]
    c_wa = vecs[4:5, A:2 * A]
    p_wa = vecs[4:5, 2 * A:3 * A]
    o_wa = vecs[4:5, 3 * A:4 * A]

    # ---------- visual (scco) LSTM cell: row-block matmuls, no lane concat ----------
    gates = (mm(h_lang_prev, W_hl) + mm(fc, W_fc) + mm(xt, W_xt)
             + mm(h_vis_prev, W_hv) + b_vis)
    i_g = jax.nn.sigmoid(gates[:, 0:R])
    f_g = jax.nn.sigmoid(gates[:, R:2 * R])
    g_g = jnp.tanh(gates[:, 2 * R:3 * R])
    o_g = jax.nn.sigmoid(gates[:, 3 * R:4 * R])
    c_vis = f_g * c_vis_prev + i_g * g_g
    h_vis = o_g * jnp.tanh(c_vis)

    # ---------- all four attention h-projections in one matmul ----------
    hproj = mm(h_vis, w_hatt) + b_hatt            # [B, 4A]
    s_hproj = hproj[:, 0:A]
    c_hproj = hproj[:, A:2 * A]
    p_hproj = hproj[:, 2 * A:3 * A]
    o_hproj = hproj[:, 3 * A:4 * A]

    def att_weights(h_proj, feats_proj, wa):
        # softmax over N (the torch score bias is a constant -> cancels, dropped)
        dot = jnp.tanh(h_proj[:, None, :] + feats_proj)           # [B,N,A]
        e = jnp.sum(dot * wa[None, :, :], axis=-1)                # [B,N]
        e = e - jnp.max(e, axis=1, keepdims=True)
        w = jnp.exp(e)
        return w / jnp.sum(w, axis=1, keepdims=True)              # exact divide

    def pool(wts, f3d):
        return jnp.sum(wts[:, :, None] * f3d, axis=1)             # [B,R]

    # ---------- SingleSP ----------
    single_feat = pool(att_weights(s_hproj, proi, s_wa), roi)

    # ---------- ContextSP ----------
    context_feat = pool(att_weights(c_hproj, ctx_proj, c_wa), ctx)

    # ---------- CompSP (ComputeRelation + attention; att_masks is None) ----------
    rel = context_feat[:, None, :] - roi
    # linearity: (ctx_feat - roi) @ p_wv + b == (ctx_feat @ p_wv + b) - roi @ p_wv
    rel_proj = (mm(context_feat, p_wv) + p_wvb)[:, None, :] - roi_pv
    comp_feat = pool(att_weights(p_hproj, rel_proj, p_wa), rel)

    # ---------- OutputSP over {single, comp, fc}: 3 candidates batched ----------
    cand = jnp.concatenate([single_feat, comp_feat, fc], axis=0)   # [3B, R]
    cproj = mm(cand, o_wv) + o_wvb                                 # [3B, A]
    o_h3 = jnp.concatenate([o_hproj, o_hproj, o_hproj], axis=0)    # [3B, A]
    e_all = jnp.sum(jnp.tanh(o_h3 + cproj) * o_wa, axis=-1, keepdims=True)  # [3B,1]
    e_s = e_all[0:B]
    e_c = e_all[B:2 * B]
    e_f = e_all[2 * B:3 * B]
    m = jnp.maximum(jnp.maximum(e_s, e_c), e_f)
    x_s = jnp.exp(e_s - m)
    x_c = jnp.exp(e_c - m)
    x_f = jnp.exp(e_f - m)
    output_feats = (x_s * single_feat + x_c * comp_feat + x_f * fc) / (x_s + x_c + x_f)

    # ---------- lang LSTM cell: row-block matmuls, no lane concat ----------
    gates2 = (mm(output_feats, L_of) + mm(h_vis, L_hv)
              + mm(h_lang_prev, L_hl) + b_lang)
    i2 = jax.nn.sigmoid(gates2[:, 0:R])
    f2 = jax.nn.sigmoid(gates2[:, R:2 * R])
    g2 = jnp.tanh(gates2[:, 2 * R:3 * R])
    o2 = jax.nn.sigmoid(gates2[:, 3 * R:4 * R])
    c_lang = f2 * c_lang_prev + i2 * g2
    h_lang = o2 * jnp.tanh(c_lang)

    # ---------- carry state + single lane-dense per-step output ----------
    new_state = jnp.concatenate([h_vis, h_lang, c_vis, c_lang], axis=1)    # [B, 4R]
    st_ref[...] = new_state
    out_ref[0] = jnp.concatenate([new_state, output_feats], axis=1)        # [B, 5R]


# -----------------------------------------------------------------------------
# Wrapper: one pallas_call for T decode steps.
# -----------------------------------------------------------------------------
def cavp_core_decode(xt_seq, fc_feats, roi_feats, p_roi_feats, context_feats,
                     state_h, state_c, w_slab, offs, E, R, A):
    T, B = xt_seq.shape[0], xt_seq.shape[1]
    N = roi_feats.shape[1]

    # Constant-across-steps packing, done ONCE per call (hoisted off the step path):
    #   feats slab  [B, N, 2R+3A] = [roi | ctx | proi | roi@p_wv | ctx@c_wv + b]
    #   init slab   [B, 5R]       = [h_vis0 | h_lang0 | c_vis0 | c_lang0 | fc]
    c_wv = w_slab[offs['wv']:offs['wv'] + R, 0:A]
    p_wv = w_slab[offs['wv']:offs['wv'] + R, A:2 * A]
    c_wvb = w_slab[offs['vec'] + 3, 0:A]
    roi_pv = (roi_feats.reshape(B * N, R) @ p_wv).reshape(B, N, A)
    ctx_proj = (context_feats.reshape(B * N, R) @ c_wv + c_wvb).reshape(B, N, A)
    feats = jnp.concatenate(
        [roi_feats, context_feats, p_roi_feats, roi_pv, ctx_proj], axis=2)
    init = jnp.concatenate(
        [state_h[0], state_h[1], state_c[0], state_c[1], fc_feats], axis=1)

    kernel = functools.partial(cavp_core_kernel, E=E, R=R, A=A, offs=offs)
    grid_spec = pltpu.PrefetchScalarGridSpec(
        num_scalar_prefetch=0,
        grid=(T,),
        in_specs=[
            pl.BlockSpec(w_slab.shape, lambda t: (0, 0)),              # resident weights
            pl.BlockSpec((B, 5 * R), lambda t: (0, 0)),                # resident init/fc
            pl.BlockSpec((B, N, 2 * R + 3 * A), lambda t: (0, 0, 0)),  # resident feats
            pl.BlockSpec((1, B, E), lambda t: (t, 0, 0)),              # per-step xt
        ],
        out_specs=pl.BlockSpec((1, B, 5 * R), lambda t: (t, 0, 0)),    # lane-dense slab
        scratch_shapes=[pltpu.VMEM((B, 4 * R), jnp.float32)],          # carried h/c state
    )
    out_seq = pl.pallas_call(
        kernel,
        out_shape=jax.ShapeDtypeStruct((T, B, 5 * R), jnp.float32),
        grid_spec=grid_spec,
        compiler_params=pltpu.CompilerParams(
            dimension_semantics=("arbitrary",)),   # sequential: state carried across T
    )(w_slab, init, feats, xt_seq)

    h_vis_seq = out_seq[:, :, 0:R]
    h_lang_seq = out_seq[:, :, R:2 * R]
    c_vis_seq = out_seq[:, :, 2 * R:3 * R]
    c_lang_seq = out_seq[:, :, 3 * R:4 * R]
    ofeat_seq = out_seq[:, :, 4 * R:5 * R]
    out_seq_h = h_lang_seq                     # eval-mode dropout is identity
    new_h = jnp.stack([h_vis_seq[-1], h_lang_seq[-1]])
    new_c = jnp.stack([c_vis_seq[-1], c_lang_seq[-1]])
    return out_seq_h, new_h, new_c, ofeat_seq


# -----------------------------------------------------------------------------
# Deterministic parameter construction (PyTorch-style uniform init)
# -----------------------------------------------------------------------------
def init_raw_params(key, E, R, A):
    keys = iter(jax.random.split(key, 64))

    def lin(out_dim, in_dim):
        bound = 1.0 / float(np.sqrt(in_dim))
        w = jax.random.uniform(next(keys), (out_dim, in_dim), jnp.float32, -bound, bound)
        b = jax.random.uniform(next(keys), (out_dim,), jnp.float32, -bound, bound)
        return w, b

    p = {}
    p['v_wih'], p['v_bih'] = lin(4 * R, E + 2 * R)   # scco_lstm
    p['v_whh'], p['v_bhh'] = lin(4 * R, R)
    p['l_wih'], p['l_bih'] = lin(4 * R, 2 * R)       # lang_lstm
    p['l_whh'], p['l_bhh'] = lin(4 * R, R)
    p['s_wh_w'], p['s_wh_b'] = lin(A, R)             # single_sp
    p['s_wa_w'], p['s_wa_b'] = lin(1, A)
    p['c_wh_w'], p['c_wh_b'] = lin(A, R)             # context_sp
    p['c_wv_w'], p['c_wv_b'] = lin(A, R)
    p['c_wa_w'], p['c_wa_b'] = lin(1, A)
    p['p_wh_w'], p['p_wh_b'] = lin(A, R)             # comp_sp
    p['p_wv_w'], p['p_wv_b'] = lin(A, R)
    p['p_wa_w'], p['p_wa_b'] = lin(1, A)
    p['o_wv_w'], p['o_wv_b'] = lin(A, R)             # output_sp
    p['o_wh_w'], p['o_wh_b'] = lin(A, R)
    p['o_wa_w'], p['o_wa_b'] = lin(1, A)
    # ComputeRelation.proj exists in __init__ but is unused in forward -> omitted.
    return p


# -----------------------------------------------------------------------------
# Pure-JAX reference (mirrors the PyTorch forward, att_masks=None, eval mode)
# -----------------------------------------------------------------------------
def ref_forward(p, xt, fc, roi, proi, ctx, sh, sc):
    def linear(x, w, b):
        return x @ w.T + b

    def lstm_cell(x, h, c, wih, whh, bih, bhh):
        R = h.shape[1]
        g = x @ wih.T + bih + h @ whh.T + bhh
        i = jax.nn.sigmoid(g[:, :R])
        f = jax.nn.sigmoid(g[:, R:2 * R])
        gg = jnp.tanh(g[:, 2 * R:3 * R])
        o = jax.nn.sigmoid(g[:, 3 * R:])
        c2 = f * c + i * gg
        return o * jnp.tanh(c2), c2

    def att(hproj, feats_proj, wa_w, wa_b):
        dot = hproj[:, None, :] + feats_proj
        e = jnp.tanh(dot) @ wa_w.T + wa_b     # [B,N,1]
        return jax.nn.softmax(e[..., 0], axis=1)

    prev_h = sh[1]
    env = jnp.concatenate([prev_h, fc, xt], axis=1)
    h_vis, c_vis = lstm_cell(env, sh[0], sc[0], p['v_wih'], p['v_whh'], p['v_bih'], p['v_bhh'])

    w = att(linear(h_vis, p['s_wh_w'], p['s_wh_b']), proi, p['s_wa_w'], p['s_wa_b'])
    single_feat = jnp.einsum('bn,bnr->br', w, roi)

    ctx_proj = ctx @ p['c_wv_w'].T + p['c_wv_b']
    w = att(linear(h_vis, p['c_wh_w'], p['c_wh_b']), ctx_proj, p['c_wa_w'], p['c_wa_b'])
    context_feat = jnp.einsum('bn,bnr->br', w, ctx)

    # ComputeRelation.forward: context_feat.unsqueeze(1).expand_as(roi) - roi
    rel = context_feat[:, None, :] - roi
    rel_proj = rel @ p['p_wv_w'].T + p['p_wv_b']
    w = att(linear(h_vis, p['p_wh_w'], p['p_wh_b']), rel_proj, p['p_wa_w'], p['p_wa_b'])
    comp_feat = jnp.einsum('bn,bnr->br', w, rel)

    feats = jnp.stack([single_feat, comp_feat, fc], axis=1)
    fproj = feats @ p['o_wv_w'].T + p['o_wv_b']
    w = att(linear(h_vis, p['o_wh_w'], p['o_wh_b']), fproj, p['o_wa_w'], p['o_wa_b'])
    output_feats = jnp.einsum('bn,bnr->br', w, feats)

    lang_in = jnp.concatenate([output_feats, h_vis], axis=1)
    h_lang, c_lang = lstm_cell(lang_in, sh[1], sc[1], p['l_wih'], p['l_whh'], p['l_bih'], p['l_bhh'])
    out = h_lang  # dropout in eval mode
    return out, jnp.stack([h_vis, h_lang]), jnp.stack([c_vis, c_lang]), output_feats


def ref_decode(p, xt_seq, fc, roi, proi, ctx, sh, sc):
    outs, ofeats = [], []
    h, c = sh, sc
    for t in range(xt_seq.shape[0]):
        o, h, c, of = ref_forward(p, xt_seq[t], fc, roi, proi, ctx, h, c)
        outs.append(o)
        ofeats.append(of)
    return jnp.stack(outs), h, c, jnp.stack(ofeats)


# -----------------------------------------------------------------------------
if __name__ == "__main__":
    # batch, num ROIs, input_encoding, rnn_size, att_hid_size, fused decode steps
    B, N, E, R, A, T = 2, 8, 32, 32, 32, 8

    key = jax.random.PRNGKey(0)
    kp, kx = jax.random.split(key)
    raw_params = init_raw_params(kp, E, R, A)
    w_slab, offs = pack_params(raw_params, E, R, A)

    ks = jax.random.split(kx, 7)
    xt_seq = jax.random.normal(ks[0], (T, B, E), jnp.float32)
    fc_feats = jax.random.normal(ks[1], (B, R), jnp.float32)
    roi_feats = jax.random.normal(ks[2], (B, N, R), jnp.float32)
    p_roi_feats = jax.random.normal(ks[3], (B, N, A), jnp.float32)
    context_feats = jax.random.normal(ks[4], (B, N, R), jnp.float32)
    state_h = 0.1 * jax.random.normal(ks[5], (2, B, R), jnp.float32)
    state_c = 0.1 * jax.random.normal(ks[6], (2, B, R), jnp.float32)

    out_seq, new_h, new_c, ofeat_seq = cavp_core_decode(
        xt_seq, fc_feats, roi_feats, p_roi_feats, context_feats,
        state_h, state_c, w_slab, offs, E, R, A)
    jax.block_until_ready((out_seq, new_h, new_c, ofeat_seq))

    # Correctness check vs. a pure-JAX reference of the PyTorch forward, stepped T times.
    # (Tolerance covers f32 rounding-order differences of the fused matmuls across T
    #  recurrent steps; all softmax divisions in the kernel are exact.)
    r_out, r_h, r_c, r_of = ref_decode(
        raw_params, xt_seq, fc_feats, roi_feats, p_roi_feats, context_feats,
        state_h, state_c)
    np.testing.assert_allclose(np.asarray(out_seq), np.asarray(r_out), rtol=5e-3, atol=5e-3)
    np.testing.assert_allclose(np.asarray(new_h), np.asarray(r_h), rtol=5e-3, atol=5e-3)
    np.testing.assert_allclose(np.asarray(new_c), np.asarray(r_c), rtol=5e-3, atol=5e-3)
    np.testing.assert_allclose(np.asarray(ofeat_seq), np.asarray(r_of), rtol=5e-3, atol=5e-3)

    print("KERNEL_OK")
</pallas_src>

<mosaic_0001>
module attributes {stable_mosaic.version = 11 : i64} {
  func.func @cavp_core_kernel(%arg0: i32, %arg1: memref<296x128xf32, #tpu.memory_space<vmem>>, %arg2: memref<2x160xf32, #tpu.memory_space<vmem>>, %arg3: memref<2x8x160xf32, #tpu.memory_space<vmem>>, %arg4: memref<1x2x32xf32, #tpu.memory_space<vmem>>, %arg5: memref<1x2x160xf32, #tpu.memory_space<vmem>>, %arg6: memref<2x128xf32, #tpu.memory_space<vmem>>) attributes {dimension_semantics = [#tpu.dimension_semantics<arbitrary>], iteration_bounds = array<i64: 8>, scalar_prefetch = 0 : i64, scratch_operands = 1 : i64, tpu.core_type = #tpu.core_type<tc>, window_params = [{pipeline_mode = #tpu.pipeline_mode<synchronous>, transform_indices = @transform_0, window_bounds = array<i64: 296, 128>}, {pipeline_mode = #tpu.pipeline_mode<synchronous>, transform_indices = @transform_1, window_bounds = array<i64: 2, 160>}, {pipeline_mode = #tpu.pipeline_mode<synchronous>, transform_indices = @transform_2, window_bounds = array<i64: 2, 8, 160>}, {transform_indices = @transform_3, window_bounds = array<i64: 1, 2, 32>}, {transform_indices = @transform_4, window_bounds = array<i64: 1, 2, 160>}]} {
    %c0_i32 = arith.constant 0 : i32
    %0 = arith.cmpi eq, %arg0, %c0_i32 : i32
    %1 = arith.extui %0 : i1 to i32
    %c0_i32_0 = arith.constant 0 : i32
    %2 = arith.cmpi ne, %1, %c0_i32_0 : i32
    scf.if %2 {
      %c0_56 = arith.constant 0 : index
      %c0_57 = arith.constant 0 : index
      %222 = vector.load %arg2[%c0_56, %c0_57] : memref<2x160xf32, #tpu.memory_space<vmem>>, vector<2x128xf32>
      %c0_58 = arith.constant 0 : index
      %c0_59 = arith.constant 0 : index
      %223 = vector.load %arg6[%c0_58, %c0_59] : memref<2x128xf32, #tpu.memory_space<vmem>>, vector<2x128xf32>
      tpu.vector_store %arg6[%c0_58, %c0_59], %222 {strides = array<i32>} : memref<2x128xf32, #tpu.memory_space<vmem>>, vector<2x128xf32>,
    } else {
    }
    %c0 = arith.constant 0 : index
    %c128 = arith.constant 128 : index
    %3 = vector.load %arg2[%c0, %c128] : memref<2x160xf32, #tpu.memory_space<vmem>>, vector<2x32xf32>
    %c0_1 = arith.constant 0 : index
    %c0_2 = arith.constant 0 : index
    %c0_3 = arith.constant 0 : index
    %4 = vector.load %arg3[%c0_1, %c0_2, %c0_3] : memref<2x8x160xf32, #tpu.memory_space<vmem>>, vector<2x8x160xf32>
    %5 = vector.extract_strided_slice %4 {offsets = [0, 0, 0], sizes = [2, 8, 32], strides = [1, 1, 1]} : vector<2x8x160xf32> to vector<2x8x32xf32>
    %6 = vector.extract_strided_slice %4 {offsets = [0, 0, 32], sizes = [2, 8, 32], strides = [1, 1, 1]} : vector<2x8x160xf32> to vector<2x8x32xf32>
    %7 = vector.extract_strided_slice %4 {offsets = [0, 0, 64], sizes = [2, 8, 32], strides = [1, 1, 1]} : vector<2x8x160xf32> to vector<2x8x32xf32>
    %8 = vector.extract_strided_slice %4 {offsets = [0, 0, 96], sizes = [2, 8, 32], strides = [1, 1, 1]} : vector<2x8x160xf32> to vector<2x8x32xf32>
    %9 = vector.extract_strided_slice %4 {offsets = [0, 0, 128], sizes = [2, 8, 32], strides = [1, 1, 1]} : vector<2x8x160xf32> to vector<2x8x32xf32>
    %c0_4 = arith.constant 0 : index
    %c0_5 = arith.constant 0 : index
    %c0_6 = arith.constant 0 : index
    %10 = vector.load %arg4[%c0_4, %c0_5, %c0_6] : memref<1x2x32xf32, #tpu.memory_space<vmem>>, vector<1x2x32xf32>
    %11 = vector.shape_cast %10 : vector<1x2x32xf32> to vector<2x32xf32>
    %c0_7 = arith.constant 0 : index
    %c0_8 = arith.constant 0 : index
    %12 = vector.load %arg6[%c0_7, %c0_8] : memref<2x128xf32, #tpu.memory_space<vmem>>, vector<2x128xf32>
    %13 = vector.extract_strided_slice %12 {offsets = [0, 0], sizes = [2, 32], strides = [1, 1]} : vector<2x128xf32> to vector<2x32xf32>
    %14 = vector.extract_strided_slice %12 {offsets = [0, 32], sizes = [2, 32], strides = [1, 1]} : vector<2x128xf32> to vector<2x32xf32>
    %15 = vector.extract_strided_slice %12 {offsets = [0, 64], sizes = [2, 32], strides = [1, 1]} : vector<2x128xf32> to vector<2x32xf32>
    %16 = vector.extract_strided_slice %12 {offsets = [0, 96], sizes = [2, 32], strides = [1, 1]} : vector<2x128xf32> to vector<2x32xf32>
    %c0_9 = arith.constant 0 : index
    %c0_10 = arith.constant 0 : index
    %17 = vector.load %arg1[%c0_9, %c0_10] : memref<296x128xf32, #tpu.memory_space<vmem>>, vector<32x128xf32>
    %c32 = arith.constant 32 : index
    %c0_11 = arith.constant 0 : index
    %18 = vector.load %arg1[%c32, %c0_11] : memref<296x128xf32, #tpu.memory_space<vmem>>, vector<32x128xf32>
    %c64 = arith.constant 64 : index
    %c0_12 = arith.constant 0 : index
    %19 = vector.load %arg1[%c64, %c0_12] : memref<296x128xf32, #tpu.memory_space<vmem>>, vector<32x128xf32>
    %c96 = arith.constant 96 : index
    %c0_13 = arith.constant 0 : index
    %20 = vector.load %arg1[%c96, %c0_13] : memref<296x128xf32, #tpu.memory_space<vmem>>, vector<32x128xf32>
    %c128_14 = arith.constant 128 : index
    %c0_15 = arith.constant 0 : index
    %21 = vector.load %arg1[%c128_14, %c0_15] : memref<296x128xf32, #tpu.memory_space<vmem>>, vector<32x128xf32>
    %c160 = arith.constant 160 : index
    %c0_16 = arith.constant 0 : index
    %22 = vector.load %arg1[%c160, %c0_16] : memref<296x128xf32, #tpu.memory_space<vmem>>, vector<32x128xf32>
    %c192 = arith.constant 192 : index
    %c0_17 = arith.constant 0 : index
    %23 = vector.load %arg1[%c192, %c0_17] : memref<296x128xf32, #tpu.memory_space<vmem>>, vector<32x128xf32>
    %c224 = arith.constant 224 : index
    %c0_18 = arith.constant 0 : index
    %24 = vector.load %arg1[%c224, %c0_18] : memref<296x128xf32, #tpu.memory_space<vmem>>, vector<32x128xf32>
    %c256 = arith.constant 256 : index
    %c32_19 = arith.constant 32 : index
    %25 = vector.load %arg1[%c256, %c32_19] : memref<296x128xf32, #tpu.memory_space<vmem>>, vector<32x32xf32>
    %c256_20 = arith.constant 256 : index
    %c64_21 = arith.constant 64 : index
    %26 = vector.load %arg1[%c256_20, %c64_21] : memref<296x128xf32, #tpu.memory_space<vmem>>, vector<32x32xf32>
    %c288 = arith.constant 288 : index
    %c0_22 = arith.constant 0 : index
    %27 = vector.load %arg1[%c288, %c0_22] : memref<296x128xf32, #tpu.memory_space<vmem>>, vector<5x128xf32>
    %28 = vector.extract_strided_slice %27 {offsets = [0, 0], sizes = [1, 128], strides = [1, 1]} : vector<5x128xf32> to vector<1x128xf32>
    %29 = vector.extract_strided_slice %27 {offsets = [1, 0], sizes = [1, 128], strides = [1, 1]} : vector<5x128xf32> to vector<1x128xf32>
    %30 = vector.extract_strided_slice %27 {offsets = [2, 0], sizes = [1, 128], strides = [1, 1]} : vector<5x128xf32> to vector<1x128xf32>
    %31 = vector.extract_strided_slice %27 {offsets = [3, 32], sizes = [1, 32], strides = [1, 1]} : vector<5x128xf32> to vector<1x32xf32>
    %32 = vector.extract_strided_slice %27 {offsets = [3, 64], sizes = [1, 32], strides = [1, 1]} : vector<5x128xf32> to vector<1x32xf32>
    %33 = vector.extract_strided_slice %27 {offsets = [4, 0], sizes = [1, 32], strides = [1, 1]} : vector<5x128xf32> to vector<1x32xf32>
    %34 = vector.extract_strided_slice %27 {offsets = [4, 32], sizes = [1, 32], strides = [1, 1]} : vector<5x128xf32> to vector<1x32xf32>
    %35 = vector.extract_strided_slice %27 {offsets = [4, 64], sizes = [1, 32], strides = [1, 1]} : vector<5x128xf32> to vector<1x32xf32>
    %36 = vector.extract_strided_slice %27 {offsets = [4, 96], sizes = [1, 32], strides = [1, 1]} : vector<5x128xf32> to vector<1x32xf32>
    %cst = arith.constant dense<0.000000e+00> : vector<2x128xf32>
    %37 = tpu.matmul %14, %17, %cst {dimension_numbers = #tpu.dot_dimension_numbers<[1], [0], [0], [1], [0, 0, 1, 1], [], []>} : vector<2x32xf32>, vector<32x128xf32>, vector<2x128xf32> -> vector<2x128xf32>
    %cst_23 = arith.constant dense<0.000000e+00> : vector<2x128xf32>
    %38 = tpu.matmul %3, %18, %cst_23 {dimension_numbers = #tpu.dot_dimension_numbers<[1], [0], [0], [1], [0, 0, 1, 1], [], []>} : vector<2x32xf32>, vector<32x128xf32>, vector<2x128xf32> -> vector<2x128xf32>
    %39 = arith.addf %37, %38 : vector<2x128xf32>
    %cst_24 = arith.constant dense<0.000000e+00> : vector<2x128xf32>
    %40 = tpu.matmul %11, %19, %cst_24 {dimension_numbers = #tpu.dot_dimension_numbers<[1], [0], [0], [1], [0, 0, 1, 1], [], []>} : vector<2x32xf32>, vector<32x128xf32>, vector<2x128xf32> -> vector<2x128xf32>
    %41 = arith.addf %39, %40 : vector<2x128xf32>
    %cst_25 = arith.constant dense<0.000000e+00> : vector<2x128xf32>
    %42 = tpu.matmul %13, %20, %cst_25 {dimension_numbers = #tpu.dot_dimension_numbers<[1], [0], [0], [1], [0, 0, 1, 1], [], []>} : vector<2x32xf32>, vector<32x128xf32>, vector<2x128xf32> -> vector<2x128xf32>
    %43 = arith.addf %41, %42 : vector<2x128xf32>
    %44 = vector.broadcast %28 : vector<1x128xf32> to vector<2x128xf32>
    %45 = arith.addf %43, %44 : vector<2x128xf32>
    %46 = vector.extract_strided_slice %45 {offsets = [0, 0], sizes = [2, 32], strides = [1, 1]} : vector<2x128xf32> to vector<2x32xf32>
    %47 = arith.negf %46 : vector<2x32xf32>
    %48 = math.exp %47 : vector<2x32xf32>
    %cst_26 = arith.constant 1.000000e+00 : f32
    %49 = vector.broadcast %cst_26 : f32 to vector<2x32xf32>
    %50 = arith.addf %49, %48 : vector<2x32xf32>
    %51 = arith.divf %49, %50 : vector<2x32xf32>
    %52 = vector.extract_strided_slice %45 {offsets = [0, 32], sizes = [2, 32], strides = [1, 1]} : vector<2x128xf32> to vector<2x32xf32>
    %53 = arith.negf %52 : vector<2x32xf32>
    %54 = math.exp %53 : vector<2x32xf32>
    %cst_27 = arith.constant 1.000000e+00 : f32
    %55 = vector.broadcast %cst_27 : f32 to vector<2x32xf32>
    %56 = arith.addf %55, %54 : vector<2x32xf32>
    %57 = arith.divf %55, %56 : vector<2x32xf32>
    %58 = vector.extract_strided_slice %45 {offsets = [0, 64], sizes = [2, 32], strides = [1, 1]} : vector<2x128xf32> to vector<2x32xf32>
    %59 = math.tanh %58 : vector<2x32xf32>
    %60 = vector.extract_strided_slice %45 {offsets = [0, 96], sizes = [2, 32], strides = [1, 1]} : vector<2x128xf32> to vector<2x32xf32>
    %61 = arith.negf %60 : vector<2x32xf32>
    %62 = math.exp %61 : vector<2x32xf32>
    %cst_28 = arith.constant 1.000000e+00 : f32
    %63 = vector.broadcast %cst_28 : f32 to vector<2x32xf32>
    %64 = arith.addf %63, %62 : vector<2x32xf32>
    %65 = arith.divf %63, %64 : vector<2x32xf32>
    %66 = arith.mulf %57, %15 : vector<2x32xf32>
    %67 = arith.mulf %51, %59 : vector<2x32xf32>
    %68 = arith.addf %66, %67 : vector<2x32xf32>
    %69 = math.tanh %68 : vector<2x32xf32>
    %70 = arith.mulf %65, %69 : vector<2x32xf32>
    %cst_29 = arith.constant dense<0.000000e+00> : vector<2x128xf32>
    %71 = tpu.matmul %70, %24, %cst_29 {dimension_numbers = #tpu.dot_dimension_numbers<[1], [0], [0], [1], [0, 0, 1, 1], [], []>} : vector<2x32xf32>, vector<32x128xf32>, vector<2x128xf32> -> vector<2x128xf32>
    %72 = vector.broadcast %30 : vector<1x128xf32> to vector<2x128xf32>
    %73 = arith.addf %71, %72 : vector<2x128xf32>
    %74 = vector.extract_strided_slice %73 {offsets = [0, 0], sizes = [2, 32], strides = [1, 1]} : vector<2x128xf32> to vector<2x32xf32>
    %75 = vector.extract_strided_slice %73 {offsets = [0, 32], sizes = [2, 32], strides = [1, 1]} : vector<2x128xf32> to vector<2x32xf32>
    %76 = vector.extract_strided_slice %73 {offsets = [0, 64], sizes = [2, 32], strides = [1, 1]} : vector<2x128xf32> to vector<2x32xf32>
    %77 = vector.extract_strided_slice %73 {offsets = [0, 96], sizes = [2, 32], strides = [1, 1]} : vector<2x128xf32> to vector<2x32xf32>
    %78 = vector.shape_cast %74 : vector<2x32xf32> to vector<2x1x32xf32>
    %79 = vector.broadcast %78 : vector<2x1x32xf32> to vector<2x8x32xf32>
    %80 = arith.addf %79, %7 : vector<2x8x32xf32>
    %81 = math.tanh %80 : vector<2x8x32xf32>
    %82 = vector.shape_cast %33 : vector<1x32xf32> to vector<1x1x32xf32>
    %83 = vector.broadcast %82 : vector<1x1x32xf32> to vector<2x8x32xf32>
    %84 = arith.mulf %81, %83 : vector<2x8x32xf32>
    %cst_30 = arith.constant dense<0.000000e+00> : vector<2x8xf32>
    %85 = vector.multi_reduction <add>, %84, %cst_30 [2] : vector<2x8x32xf32> to vector<2x8xf32>
    %cst_31 = arith.constant dense<0xFF800000> : vector<2xf32>
    %86 = vector.multi_reduction <maximumf>, %85, %cst_31 [1] : vector<2x8xf32> to vector<2xf32>
    %87 = vector.shape_cast %86 : vector<2xf32> to vector<2x1xf32>
    %88 = vector.broadcast %87 : vector<2x1xf32> to vector<2x8xf32>
    %89 = arith.subf %85, %88 : vector<2x8xf32>
    %90 = math.exp %89 : vector<2x8xf32>
    %cst_32 = arith.constant dense<0.000000e+00> : vector<2xf32>
    %91 = vector.multi_reduction <add>, %90, %cst_32 [1] : vector<2x8xf32> to vector<2xf32>
    %92 = vector.shape_cast %91 : vector<2xf32> to vector<2x1xf32>
    %93 = vector.broadcast %92 : vector<2x1xf32> to vector<2x8xf32>
    %94 = arith.divf %90, %93 : vector<2x8xf32>
    %95 = vector.shape_cast %94 : vector<2x8xf32> to vector<2x8x1xf32>
    %96 = vector.broadcast %95 : vector<2x8x1xf32> to vector<2x8x32xf32>
    %97 = arith.mulf %96, %5 : vector<2x8x32xf32>
    %cst_33 = arith.constant dense<0.000000e+00> : vector<2x32xf32>
    %98 = vector.multi_reduction <add>, %97, %cst_33 [1] : vector<2x8x32xf32> to vector<2x32xf32>
    %99 = vector.shape_cast %75 : vector<2x32xf32> to vector<2x1x32xf32>
    %100 = vector.broadcast %99 : vector<2x1x32xf32> to vector<2x8x32xf32>
    %101 = arith.addf %100, %9 : vector<2x8x32xf32>
    %102 = math.tanh %101 : vector<2x8x32xf32>
    %103 = vector.shape_cast %34 : vector<1x32xf32> to vector<1x1x32xf32>
    %104 = vector.broadcast %103 : vector<1x1x32xf32> to vector<2x8x32xf32>
    %105 = arith.mulf %102, %104 : vector<2x8x32xf32>
    %cst_34 = arith.constant dense<0.000000e+00> : vector<2x8xf32>
    %106 = vector.multi_reduction <add>, %105, %cst_34 [2] : vector<2x8x32xf32> to vector<2x8xf32>
    %cst_35 = arith.constant dense<0xFF800000> : vector<2xf32>
    %107 = vector.multi_reduction <maximumf>, %106, %cst_35 [1] : vector<2x8xf32> to vector<2xf32>
    %108 = vector.shape_cast %107 : vector<2xf32> to vector<2x1xf32>
    %109 = vector.broadcast %108 : vector<2x1xf32> to vector<2x8xf32>
    %110 = arith.subf %106, %109 : vector<2x8xf32>
    %111 = math.exp %110 : vector<2x8xf32>
    %cst_36 = arith.constant dense<0.000000e+00> : vector<2xf32>
    %112 = vector.multi_reduction <add>, %111, %cst_36 [1] : vector<2x8xf32> to vector<2xf32>
    %113 = vector.shape_cast %112 : vector<2xf32> to vector<2x1xf32>
    %114 = vector.broadcast %113 : vector<2x1xf32> to vector<2x8xf32>
    %115 = arith.divf %111, %114 : vector<2x8xf32>
    %116 = vector.shape_cast %115 : vector<2x8xf32> to vector<2x8x1xf32>
    %117 = vector.broadcast %116 : vector<2x8x1xf32> to vector<2x8x32xf32>
    %118 = arith.mulf %117, %6 : vector<2x8x32xf32>
    %cst_37 = arith.constant dense<0.000000e+00> : vector<2x32xf32>
    %119 = vector.multi_reduction <add>, %118, %cst_37 [1] : vector<2x8x32xf32> to vector<2x32xf32>
    %120 = vector.shape_cast %119 : vector<2x32xf32> to vector<2x1x32xf32>
    %121 = vector.broadcast %120 : vector<2x1x32xf32> to vector<2x8x32xf32>
    %122 = arith.subf %121, %5 : vector<2x8x32xf32>
    %cst_38 = arith.constant dense<0.000000e+00> : vector<2x32xf32>
    %123 = tpu.matmul %119, %25, %cst_38 {dimension_numbers = #tpu.dot_dimension_numbers<[1], [0], [0], [1], [0, 0, 1, 1], [], []>} : vector<2x32xf32>, vector<32x32xf32>, vector<2x32xf32> -> vector<2x32xf32>
    %124 = vector.broadcast %31 : vector<1x32xf32> to vector<2x32xf32>
    %125 = arith.addf %123, %124 : vector<2x32xf32>
    %126 = vector.shape_cast %125 : vector<2x32xf32> to vector<2x1x32xf32>
    %127 = vector.broadcast %126 : vector<2x1x32xf32> to vector<2x8x32xf32>
    %128 = arith.subf %127, %8 : vector<2x8x32xf32>
    %129 = vector.shape_cast %76 : vector<2x32xf32> to vector<2x1x32xf32>
    %130 = vector.broadcast %129 : vector<2x1x32xf32> to vector<2x8x32xf32>
    %131 = arith.addf %130, %128 : vector<2x8x32xf32>
    %132 = math.tanh %131 : vector<2x8x32xf32>
    %133 = vector.shape_cast %35 : vector<1x32xf32> to vector<1x1x32xf32>
    %134 = vector.broadcast %133 : vector<1x1x32xf32> to vector<2x8x32xf32>
    %135 = arith.mulf %132, %134 : vector<2x8x32xf32>
    %cst_39 = arith.constant dense<0.000000e+00> : vector<2x8xf32>
    %136 = vector.multi_reduction <add>, %135, %cst_39 [2] : vector<2x8x32xf32> to vector<2x8xf32>
    %cst_40 = arith.constant dense<0xFF800000> : vector<2xf32>
    %137 = vector.multi_reduction <maximumf>, %136, %cst_40 [1] : vector<2x8xf32> to vector<2xf32>
    %138 = vector.shape_cast %137 : vector<2xf32> to vector<2x1xf32>
    %139 = vector.broadcast %138 : vector<2x1xf32> to vector<2x8xf32>
    %140 = arith.subf %136, %139 : vector<2x8xf32>
    %141 = math.exp %140 : vector<2x8xf32>
    %cst_41 = arith.constant dense<0.000000e+00> : vector<2xf32>
    %142 = vector.multi_reduction <add>, %141, %cst_41 [1] : vector<2x8xf32> to vector<2xf32>
    %143 = vector.shape_cast %142 : vector<2xf32> to vector<2x1xf32>
    %144 = vector.broadcast %143 : vector<2x1xf32> to vector<2x8xf32>
    %145 = arith.divf %141, %144 : vector<2x8xf32>
    %146 = vector.shape_cast %145 : vector<2x8xf32> to vector<2x8x1xf32>
    %147 = vector.broadcast %146 : vector<2x8x1xf32> to vector<2x8x32xf32>
    %148 = arith.mulf %147, %122 : vector<2x8x32xf32>
    %cst_42 = arith.constant dense<0.000000e+00> : vector<2x32xf32>
    %149 = vector.multi_reduction <add>, %148, %cst_42 [1] : vector<2x8x32xf32> to vector<2x32xf32>
    %150 = tpu.concatenate %98, %149, %3 in 0 : vector<2x32xf32>, vector<2x32xf32>, vector<2x32xf32> -> vector<6x32xf32>
    %cst_43 = arith.constant dense<0.000000e+00> : vector<6x32xf32>
    %151 = tpu.matmul %150, %26, %cst_43 {dimension_numbers = #tpu.dot_dimension_numbers<[1], [0], [0], [1], [0, 0, 1, 1], [], []>} : vector<6x32xf32>, vector<32x32xf32>, vector<6x32xf32> -> vector<6x32xf32>
    %152 = vector.broadcast %32 : vector<1x32xf32> to vector<6x32xf32>
    %153 = arith.addf %151, %152 : vector<6x32xf32>
    %154 = tpu.concatenate %77, %77, %77 in 0 : vector<2x32xf32>, vector<2x32xf32>, vector<2x32xf32> -> vector<6x32xf32>
    %155 = arith.addf %154, %153 : vector<6x32xf32>
    %156 = math.tanh %155 : vector<6x32xf32>
    %157 = vector.broadcast %36 : vector<1x32xf32> to vector<6x32xf32>
    %158 = arith.mulf %156, %157 : vector<6x32xf32>
    %cst_44 = arith.constant dense<0.000000e+00> : vector<6xf32>
    %159 = vector.multi_reduction <add>, %158, %cst_44 [1] : vector<6x32xf32> to vector<6xf32>
    %160 = vector.shape_cast %159 : vector<6xf32> to vector<6x1xf32>
    %161 = vector.extract_strided_slice %160 {offsets = [0, 0], sizes = [2, 1], strides = [1, 1]} : vector<6x1xf32> to vector<2x1xf32>
    %162 = vector.extract_strided_slice %160 {offsets = [2, 0], sizes = [2, 1], strides = [1, 1]} : vector<6x1xf32> to vector<2x1xf32>
    %163 = vector.extract_strided_slice %160 {offsets = [4, 0], sizes = [2, 1], strides = [1, 1]} : vector<6x1xf32> to vector<2x1xf32>
    %164 = arith.maximumf %161, %162 : vector<2x1xf32>
    %165 = arith.maximumf %164, %163 : vector<2x1xf32>
    %166 = arith.subf %161, %165 : vector<2x1xf32>
    %167 = math.exp %166 : vector<2x1xf32>
    %168 = arith.subf %162, %165 : vector<2x1xf32>
    %169 = math.exp %168 : vector<2x1xf32>
    %170 = arith.subf %163, %165 : vector<2x1xf32>
    %171 = math.exp %170 : vector<2x1xf32>
    %172 = vector.broadcast %167 : vector<2x1xf32> to vector<2x32xf32>
    %173 = arith.mulf %172, %98 : vector<2x32xf32>
    %174 = vector.broadcast %169 : vector<2x1xf32> to vector<2x32xf32>
    %175 = arith.mulf %174, %149 : vector<2x32xf32>
    %176 = arith.addf %173, %175 : vector<2x32xf32>
    %177 = vector.broadcast %171 : vector<2x1xf32> to vector<2x32xf32>
    %178 = arith.mulf %177, %3 : vector<2x32xf32>
    %179 = arith.addf %176, %178 : vector<2x32xf32>
    %180 = arith.addf %167, %169 : vector<2x1xf32>
    %181 = arith.addf %180, %171 : vector<2x1xf32>
    %182 = vector.broadcast %181 : vector<2x1xf32> to vector<2x32xf32>
    %183 = arith.divf %179, %182 : vector<2x32xf32>
    %cst_45 = arith.constant dense<0.000000e+00> : vector<2x128xf32>
    %184 = tpu.matmul %183, %21, %cst_45 {dimension_numbers = #tpu.dot_dimension_numbers<[1], [0], [0], [1], [0, 0, 1, 1], [], []>} : vector<2x32xf32>, vector<32x128xf32>, vector<2x128xf32> -> vector<2x128xf32>
    %cst_46 = arith.constant dense<0.000000e+00> : vector<2x128xf32>
    %185 = tpu.matmul %70, %22, %cst_46 {dimension_numbers = #tpu.dot_dimension_numbers<[1], [0], [0], [1], [0, 0, 1, 1], [], []>} : vector<2x32xf32>, vector<32x128xf32>, vector<2x128xf32> -> vector<2x128xf32>
    %186 = arith.addf %184, %185 : vector<2x128xf32>
    %cst_47 = arith.constant dense<0.000000e+00> : vector<2x128xf32>
    %187 = tpu.matmul %14, %23, %cst_47 {dimension_numbers = #tpu.dot_dimension_numbers<[1], [0], [0], [1], [0, 0, 1, 1], [], []>} : vector<2x32xf32>, vector<32x128xf32>, vector<2x128xf32> -> vector<2x128xf32>
    %188 = arith.addf %186, %187 : vector<2x128xf32>
    %189 = vector.broadcast %29 : vector<1x128xf32> to vector<2x128xf32>
    %190 = arith.addf %188, %189 : vector<2x128xf32>
    %191 = vector.extract_strided_slice %190 {offsets = [0, 0], sizes = [2, 32], strides = [1, 1]} : vector<2x128xf32> to vector<2x32xf32>
    %192 = arith.negf %191 : vector<2x32xf32>
    %193 = math.exp %192 : vector<2x32xf32>
    %cst_48 = arith.constant 1.000000e+00 : f32
    %194 = vector.broadcast %cst_48 : f32 to vector<2x32xf32>
    %195 = arith.addf %194, %193 : vector<2x32xf32>
    %196 = arith.divf %194, %195 : vector<2x32xf32>
    %197 = vector.extract_strided_slice %190 {offsets = [0, 32], sizes = [2, 32], strides = [1, 1]} : vector<2x128xf32> to vector<2x32xf32>
    %198 = arith.negf %197 : vector<2x32xf32>
    %199 = math.exp %198 : vector<2x32xf32>
    %cst_49 = arith.constant 1.000000e+00 : f32
    %200 = vector.broadcast %cst_49 : f32 to vector<2x32xf32>
    %201 = arith.addf %200, %199 : vector<2x32xf32>
    %202 = arith.divf %200, %201 : vector<2x32xf32>
    %203 = vector.extract_strided_slice %190 {offsets = [0, 64], sizes = [2, 32], strides = [1, 1]} : vector<2x128xf32> to vector<2x32xf32>
    %204 = math.tanh %203 : vector<2x32xf32>
    %205 = vector.extract_strided_slice %190 {offsets = [0, 96], sizes = [2, 32], strides = [1, 1]} : vector<2x128xf32> to vector<2x32xf32>
    %206 = arith.negf %205 : vector<2x32xf32>
    %207 = math.exp %206 : vector<2x32xf32>
    %cst_50 = arith.constant 1.000000e+00 : f32
    %208 = vector.broadcast %cst_50 : f32 to vector<2x32xf32>
    %209 = arith.addf %208, %207 : vector<2x32xf32>
    %210 = arith.divf %208, %209 : vector<2x32xf32>
    %211 = arith.mulf %202, %16 : vector<2x32xf32>
    %212 = arith.mulf %196, %204 : vector<2x32xf32>
    %213 = arith.addf %211, %212 : vector<2x32xf32>
    %214 = math.tanh %213 : vector<2x32xf32>
    %215 = arith.mulf %210, %214 : vector<2x32xf32>
    %216 = tpu.concatenate %70, %215, %68, %213 in 1 : vector<2x32xf32>, vector<2x32xf32>, vector<2x32xf32>, vector<2x32xf32> -> vector<2x128xf32>
    %c0_51 = arith.constant 0 : index
    %c0_52 = arith.constant 0 : index
    %217 = vector.load %arg6[%c0_51, %c0_52] : memref<2x128xf32, #tpu.memory_space<vmem>>, vector<2x128xf32>
    tpu.vector_store %arg6[%c0_51, %c0_52], %216 {strides = array<i32>} : memref<2x128xf32, #tpu.memory_space<vmem>>, vector<2x128xf32>,
    %218 = tpu.concatenate %216, %183 in 1 : vector<2x128xf32>, vector<2x32xf32> -> vector<2x160xf32>
    %c0_53 = arith.constant 0 : index
    %c0_54 = arith.constant 0 : index
    %c0_55 = arith.constant 0 : index
    %219 = vector.load %arg5[%c0_53, %c0_54, %c0_55] : memref<1x2x160xf32, #tpu.memory_space<vmem>>, vector<1x2x160xf32>
    %220 = vector.shape_cast %219 : vector<1x2x160xf32> to vector<2x160xf32>
    %221 = vector.shape_cast %218 : vector<2x160xf32> to vector<1x2x160xf32>
    tpu.vector_store %arg5[%c0_53, %c0_54, %c0_55], %221 {strides = array<i32>} : memref<1x2x160xf32, #tpu.memory_space<vmem>>, vector<1x2x160xf32>,
    return
  }
  func.func @transform_0(%arg0: i32) -> (i32, i32) {
    %c0_i32 = arith.constant 0 : i32
    %c0_i32_0 = arith.constant 0 : i32
    %c0_i32_1 = arith.constant 0 : i32
    return %c0_i32, %c0_i32_0 : i32, i32
  }
  func.func @transform_1(%arg0: i32) -> (i32, i32) {
    %c0_i32 = arith.constant 0 : i32
    %c0_i32_0 = arith.constant 0 : i32
    %c0_i32_1 = arith.constant 0 : i32
    return %c0_i32, %c0_i32_0 : i32, i32
  }
  func.func @transform_2(%arg0: i32) -> (i32, i32, i32) {
    %c0_i32 = arith.constant 0 : i32
    %c0_i32_0 = arith.constant 0 : i32
    %c0_i32_1 = arith.constant 0 : i32
    %c0_i32_2 = arith.constant 0 : i32
    return %c0_i32, %c0_i32_0, %c0_i32_1 : i32, i32, i32
  }
  func.func @transform_3(%arg0: i32) -> (i32, i32, i32) {
    %c0_i32 = arith.constant 0 : i32
    %c0_i32_0 = arith.constant 0 : i32
    %c0_i32_1 = arith.constant 0 : i32
    return %arg0, %c0_i32, %c0_i32_0 : i32, i32, i32
  }
  func.func @transform_4(%arg0: i32) -> (i32, i32, i32) {
    %c0_i32 = arith.constant 0 : i32
    %c0_i32_0 = arith.constant 0 : i32
    %c0_i32_1 = arith.constant 0 : i32
    return %arg0, %c0_i32, %c0_i32_0 : i32, i32, i32
  }
}

</mosaic_0001>

<llo_original>
// kernel: tpu_custom_call.1
$region0: #{tpu_custom_call.1}
  #allocation0 [shape = 'u32[]', space=smem, size = 0x4, offset = 0x4, fixed_abs, tag = 'smem constant byte address 0x4 - core index']
  #allocation1 [shape = 'u32[144,128]{1,0:T(1,128)}', space=vmem, size = 0x12000, scoped, tag = 'internal scratch']
  #allocation2 [shape = 'f32[2,128]{1,0:T(2,128)}', space=vmem, size = 0x400, scoped, tag = 'scratch operand']
  %s0 = inlined_call_operand.hbm [shape: f32[296,128], index: 0, kind: input, shape index: {}]
  %s1 = inlined_call_operand.hbm [shape: f32[2,160], index: 1, kind: input, shape index: {}]
  %s2 = inlined_call_operand.hbm [shape: f32[2,8,160], index: 2, kind: input, shape index: {}]
  %s3 = inlined_call_operand.hbm [shape: f32[8,2,32], index: 3, kind: input, shape index: {}]
  %s4 = inlined_call_operand.hbm [shape: f32[8,2,160], index: 4, kind: output, shape index: {}]
  %s5 = sld [smem:[#allocation0]]
  $region69: #{tpu_custom_call.1} parent=0
    _
  %s7 = ssub.s32 1, %s5
  %s8 = scalar_select 0, %s7, %s5
  $region1: #{tpu_custom_call.1} parent=0
    #allocation3 [shape = 'u8[151552]{0}', space=vmem, size = 0x25000, scoped, tag = 'input window, operand 0, single buffered']
    #allocation4 [shape = 's32[2]{0}', space=sflag, size = 0x8, scoped, tag = 'scoped memory for tpu_custom_call.1']
    #allocation5 [shape = 's32[2]{0}', space=sflag, size = 0x8, scoped, tag = 'scoped memory for tpu_custom_call.1']
    #allocation6 [shape = 'u8[2048]{0}', space=vmem, size = 0x800, scoped, tag = 'input window, operand 1, single buffered']
    #allocation7 [shape = 's32[1]{0}', space=sflag, size = 0x4, scoped, tag = 'scoped memory for tpu_custom_call.1']
    #allocation8 [shape = 'u8[16384]{0}', space=vmem, size = 0x4000, scoped, tag = 'input window, operand 2, single buffered']
    #allocation9 [shape = 'u8[2048]{0}', space=vmem, size = 0x800, scoped, tag = 'input window, operand 3']
    #allocation10 [shape = 's32[2]{0}', space=sflag, size = 0x8, scoped, tag = 'scoped memory for tpu_custom_call.1']
    #allocation11 [shape = 'u8[4096]{0}', space=vmem, size = 0x1000, scoped, tag = 'output window, operand 0']
    %9 = vsyncpa [#allocation4], 0
    %10 = vsyncpa [#allocation7], 0
    %11 = vsyncpa [#allocation10], 0
    %s12 = scalar_lea.sflag [#allocation10], 1
    %13 = vsyncpa %s12, 0
    %14 = vsyncpa [#allocation5], 0
    %s15 = scalar_lea.sflag [#allocation5], 1
    %16 = vsyncpa %s15, 0
    loop: start=0, step=1, limit=10
    $region2: #{tpu_custom_call.1} parent=1 // loop_pre_header
      _
    $region3: #{tpu_custom_call.1} parent=1 // loop_header
      %s18 = sphi 0, %s22
      %p19 = scmp.ge.s32.totalorder %s18, 10
      %s26 = sphi 0, %s26
      %s28 = sphi 0, %s26
      %s29 = sphi 0, %s28
      %s43 = sphi 0, %s29
      %s47 = sphi 0, %s47
      %s49 = sphi 0, %s47
      %s50 = sphi 0, %s49
      %s64 = sphi 0, %s50
      %s68 = sphi 0, %s68
      %s70 = sphi 0, %s68
      %s71 = sphi 0, %s70
      %s85 = sphi 0, %s71
      %s91 = sphi 0, %s93
      %s94 = sphi 0, %s91
      %s95 = sphi 0, %s94
      %s111 = sphi 0, %s95
      %s117 = sphi 0, %s119
      %s120 = sphi 0, %s117
      %s121 = sphi 0, %s120
      %s137 = sphi 0, %s121
    $region4: #{tpu_custom_call.1} parent=1 // loop_header_branch
      %21 = sbr.rel (%p19) target = $region8
    $region5: #{tpu_custom_call.1} parent=1 // loop_body
      %s23 = ssub.s32 %s18, 1
      %s24 = ssub.s32 %s18, 2
      %s25 = sadd.s32 %s18, 1
      %s27 = sadd.s32 %s26, 1
      %p30 = scmp.eq.s32.totalorder %s18, 7
      %p31 = scmp.ne.s32.totalorder %s26, %s28
      %p32 = scmp.eq.s32.totalorder %s18, 0
      %p33 = por %p31, %p32
      %p34 = scmp.ne.s32.totalorder %s26, %s28
      %p35 = scmp.eq.s32.totalorder %s23, 7
      %p36 = por %p34, %p35
      %p37 = scmp.ne.s32.totalorder %s28, %s29
      %p38 = scmp.eq.s32.totalorder %s23, 0
      %p39 = por %p37, %p38
      %p40 = scmp.ne.s32.totalorder %s28, %s29
      %p41 = scmp.eq.s32.totalorder %s24, 7
      %p42 = por %p40, %p41
      %p44 = scmp.ne.s32.totalorder %s29, %s43
      %p45 = scmp.eq.s32.totalorder %s24, 0
      %p46 = por %p44, %p45
      %s48 = sadd.s32 %s47, 1
      %p51 = scmp.eq.s32.totalorder %s18, 7
      %p52 = scmp.ne.s32.totalorder %s47, %s49
      %p53 = scmp.eq.s32.totalorder %s18, 0
      %p54 = por %p52, %p53
      %p55 = scmp.ne.s32.totalorder %s47, %s49
      %p56 = scmp.eq.s32.totalorder %s23, 7
      %p57 = por %p55, %p56
      %p58 = scmp.ne.s32.totalorder %s49, %s50
      %p59 = scmp.eq.s32.totalorder %s23, 0
      %p60 = por %p58, %p59
      %p61 = scmp.ne.s32.totalorder %s49, %s50
      %p62 = scmp.eq.s32.totalorder %s24, 7
      %p63 = por %p61, %p62
      %p65 = scmp.ne.s32.totalorder %s50, %s64
      %p66 = scmp.eq.s32.totalorder %s24, 0
      %p67 = por %p65, %p66
      %s69 = sadd.s32 %s68, 1
      %p72 = scmp.eq.s32.totalorder %s18, 7
      %p73 = scmp.ne.s32.totalorder %s68, %s70
      %p74 = scmp.eq.s32.totalorder %s18, 0
      %p75 = por %p73, %p74
      %p76 = scmp.ne.s32.totalorder %s68, %s70
      %p77 = scmp.eq.s32.totalorder %s23, 7
      %p78 = por %p76, %p77
      %p79 = scmp.ne.s32.totalorder %s70, %s71
      %p80 = scmp.eq.s32.totalorder %s23, 0
      %p81 = por %p79, %p80
      %p82 = scmp.ne.s32.totalorder %s70, %s71
      %p83 = scmp.eq.s32.totalorder %s24, 7
      %p84 = por %p82, %p83
      %p86 = scmp.ne.s32.totalorder %s71, %s85
      %p87 = scmp.eq.s32.totalorder %s24, 0
      %p88 = por %p86, %p87
      %s89 = ssub.s32 %s18, %s25
      %p90 = scmp.eq.s32.totalorder %s89, 0
      %s92 = sadd.s32 %s91, 1
      %s93 = scalar_select %p90, %s91, %s92
      %p96 = pneg %p90
      %p97 = scmp.eq.s32.totalorder %s18, 7
      %p98 = por %p96, %p97
      %p99 = scmp.ne.s32.totalorder %s91, %s94
      %p100 = scmp.eq.s32.totalorder %s18, 0
      %p101 = por %p99, %p100
      %p102 = scmp.ne.s32.totalorder %s91, %s94
      %p103 = scmp.eq.s32.totalorder %s23, 7
      %p104 = por %p102, %p103
      %p105 = scmp.ne.s32.totalorder %s94, %s95
      %p106 = scmp.eq.s32.totalorder %s23, 0
      %p107 = por %p105, %p106
      %p108 = scmp.ne.s32.totalorder %s94, %s95
      %p109 = scmp.eq.s32.totalorder %s24, 7
      %p110 = por %p108, %p109
      %p112 = scmp.ne.s32.totalorder %s95, %s111
      %p113 = scmp.eq.s32.totalorder %s24, 0
      %p114 = por %p112, %p113
      %s115 = ssub.s32 %s18, %s25
      %p116 = scmp.eq.s32.totalorder %s115, 0
      %s118 = sadd.s32 %s117, 1
      %s119 = scalar_select %p116, %s117, %s118
      %p122 = pneg %p116
      %p123 = scmp.eq.s32.totalorder %s18, 7
      %p124 = por %p122, %p123
      %p125 = scmp.ne.s32.totalorder %s117, %s120
      %p126 = scmp.eq.s32.totalorder %s18, 0
      %p127 = por %p125, %p126
      %p128 = scmp.ne.s32.totalorder %s117, %s120
      %p129 = scmp.eq.s32.totalorder %s23, 7
      %p130 = por %p128, %p129
      %p131 = scmp.ne.s32.totalorder %s120, %s121
      %p132 = scmp.eq.s32.totalorder %s23, 0
      %p133 = por %p131, %p132
      %p134 = scmp.ne.s32.totalorder %s120, %s121
      %p135 = scmp.eq.s32.totalorder %s24, 7
      %p136 = por %p134, %p135
      %p138 = scmp.ne.s32.totalorder %s121, %s137
      %p139 = scmp.eq.s32.totalorder %s24, 0
      %p140 = por %p138, %p139
      %p141 = scmp.le.s32.totalorder 1, %s18
      %p142 = scmp.lt.s32.totalorder %s18, 9
      %p143 = pnand %p141, %p142
      %p144 = pneg %p143
      // Predicated region
      $region9: #{tpu_custom_call.1} parent=5 // pred_check
        _
      $region10: #{tpu_custom_call.1} parent=5 // pred_check_branch
        %146 = sbr.rel (%p143) target = $region12
      $region11: #{tpu_custom_call.1} parent=5 // pred_region
        %s147 = ssub.s32 %s18, 1
        // Predicated region
        $region13: #{tpu_custom_call.1} parent=11 // pred_check
          %p148 = pneg %p39
        $region14: #{tpu_custom_call.1} parent=11 // pred_check_branch
          %150 = sbr.rel (%p148) target = $region16
        $region15: #{tpu_custom_call.1} parent=11 // pred_region
          %s152 = ssub.s32 4736, 4736
          %153 = vsyncadd [#allocation4], %s152
          %s154 = sshll.u32 [#allocation3], 4
          %s155 = int_to_ptr.vmem [resolvable:$true] %s154
          %160 = dma.hbm_to_vmem [thread:$0]  %s0, 4736, %s155, [#allocation4], 128, 128, 8
        $region16: #{tpu_custom_call.1} parent=11 // pred_fallthru
          _
        // Predicated region
        $region17: #{tpu_custom_call.1} parent=11 // pred_check
          %p161 = pneg %p60
        $region18: #{tpu_custom_call.1} parent=11 // pred_check_branch
          %163 = sbr.rel (%p161) target = $region20
        $region19: #{tpu_custom_call.1} parent=11 // pred_region
          %s165 = ssub.s32 64, 64
          %166 = vsyncadd [#allocation7], %s165
          %s168 = sshll.u32 [#allocation6], 4
          %s169 = int_to_ptr.vmem [resolvable:$true] %s168
          %171 = dma.hbm_to_vmem [thread:$0]  %s1, 64, %s169, [#allocation7]
        $region20: #{tpu_custom_call.1} parent=11 // pred_fallthru
          _
        // Predicated region
        $region21: #{tpu_custom_call.1} parent=11 // pred_check
          %p172 = pneg %p81
        $region22: #{tpu_custom_call.1} parent=11 // pred_check_branch
          %174 = sbr.rel (%p172) target = $region24
        $region23: #{tpu_custom_call.1} parent=11 // pred_region
          %s176 = ssub.s32 512, 512
          %177 = vsyncadd [#allocation7], %s176
          %s178 = sshll.u32 [#allocation8], 4
          %s179 = int_to_ptr.vmem [resolvable:$true] %s178
          %184 = dma.hbm_to_vmem [thread:$0]  %s2, 512, %s179, [#allocation7], 256, 256, 16
        $region24: #{tpu_custom_call.1} parent=11 // pred_fallthru
          _
      $region12: #{tpu_custom_call.1} parent=5 // pred_fallthru
        _
      %p185 = scmp.lt.s32.totalorder %s18, 8
      // Predicated region
      $region25: #{tpu_custom_call.1} parent=5 // pred_check
        %p186 = pneg %p185
      $region26: #{tpu_custom_call.1} parent=5 // pred_check_branch
        %188 = sbr.rel (%p186) target = $region28
      $region27: #{tpu_custom_call.1} parent=5 // pred_region
        // Predicated region
        $region29: #{tpu_custom_call.1} parent=27 // pred_check
          %p189 = pneg %p101
        $region30: #{tpu_custom_call.1} parent=27 // pred_check_branch
          %191 = sbr.rel (%p189) target = $region32
        $region31: #{tpu_custom_call.1} parent=27 // pred_region
          %s192 = sand.u32 %s91, 1
          %s193 = scalar_lea.sflag [#allocation10], %s192
          %s194 = sand.u32 %s91, 1
          %s195 = smul.addr %s194, 2
          %s196 = scalar_lea.vmem [#allocation9], %s195
          %s198 = ssub.s32 32, 32
          %199 = vsyncadd %s193, %s198
          %s200 = smul.addr %s18, 32
          %s201 = scalar_lea.hbm %s3, %s200
          %s203 = sshll.u32 %s196, 4
          %s204 = int_to_ptr.vmem [resolvable:$true] %s203
          %206 = dma.hbm_to_vmem [thread:$0]  %s201, 32, %s204, %s193
        $region32: #{tpu_custom_call.1} parent=27 // pred_fallthru
          _
      $region28: #{tpu_custom_call.1} parent=5 // pred_fallthru
        _
      %p207 = scmp.le.s32.totalorder 1, %s18
      %p208 = scmp.lt.s32.totalorder %s18, 9
      %p209 = pnand %p207, %p208
      %p210 = pneg %p209
      // Predicated region
      $region33: #{tpu_custom_call.1} parent=5 // pred_check
        _
      $region34: #{tpu_custom_call.1} parent=5 // pred_check_branch
        %212 = sbr.rel (%p209) target = $region36
      $region35: #{tpu_custom_call.1} parent=5 // pred_region
        %s213 = ssub.s32 %s18, 1
        // Predicated region
        $region37: #{tpu_custom_call.1} parent=35 // pred_check
          %p214 = pneg %p39
        $region38: #{tpu_custom_call.1} parent=35 // pred_check_branch
          %216 = sbr.rel (%p214) target = $region40
        $region39: #{tpu_custom_call.1} parent=35 // pred_region
          %217 = dma.done [#allocation4], 4736
        $region40: #{tpu_custom_call.1} parent=35 // pred_fallthru
          _
        // Predicated region
        $region41: #{tpu_custom_call.1} parent=35 // pred_check
          %p218 = pneg %p60
        $region42: #{tpu_custom_call.1} parent=35 // pred_check_branch
          %220 = sbr.rel (%p218) target = $region44
        $region43: #{tpu_custom_call.1} parent=35 // pred_region
          %221 = dma.done [#allocation7], 64
        $region44: #{tpu_custom_call.1} parent=35 // pred_fallthru
          _
        // Predicated region
        $region45: #{tpu_custom_call.1} parent=35 // pred_check
          %p222 = pneg %p81
        $region46: #{tpu_custom_call.1} parent=35 // pred_check_branch
          %224 = sbr.rel (%p222) target = $region48
        $region47: #{tpu_custom_call.1} parent=35 // pred_region
          %225 = dma.done [#allocation7], 512
        $region48: #{tpu_custom_call.1} parent=35 // pred_fallthru
          _
        %s226 = sand.u32 %s94, 1
        %s227 = scalar_lea.sflag [#allocation10], %s226
        %s228 = sand.u32 %s94, 1
        %s229 = smul.addr %s228, 2
        %s230 = scalar_lea.vmem [#allocation9], %s229
        // Predicated region
        $region49: #{tpu_custom_call.1} parent=35 // pred_check
          %p231 = pneg %p107
        $region50: #{tpu_custom_call.1} parent=35 // pred_check_branch
          %233 = sbr.rel (%p231) target = $region52
        $region51: #{tpu_custom_call.1} parent=35 // pred_region
          %234 = dma.done %s227, 32
        $region52: #{tpu_custom_call.1} parent=35 // pred_fallthru
          _
        %p235 = pneg %p39
        %p236 = pneg %p36
        %p237 = pneg %p60
        %p238 = pneg %p57
        %p239 = pneg %p81
        %p240 = pneg %p78
        %s241 = sand.u32 %s94, 1
        %s242 = scalar_lea.sflag [#allocation10], %s241
        %s243 = sand.u32 %s94, 1
        %s244 = smul.addr %s243, 2
        %s245 = scalar_lea.vmem [#allocation9], %s244
        %p246 = pneg %p107
        %p247 = pneg %p104
        %p248 = pneg %p133
        %p249 = pneg %p130
        %s250 = sand.u32 %s120, 1
        %s251 = scalar_lea.sflag [#allocation5], %s250
        %s252 = sand.u32 %s120, 1
        %s253 = smul.addr %s252, 4
        %s254 = scalar_lea.vmem [#allocation11], %s253
        %p255 = scmp.eq.s32.totalorder %s23, 0
        // Predicated region
        $region53: #{tpu_custom_call.1} parent=35 // pred_check
          %p256 = pneg %p255
        $region54: #{tpu_custom_call.1} parent=35 // pred_check_branch
          %258 = sbr.rel (%p256) target = $region56
        $region55: #{tpu_custom_call.1} parent=35 // pred_region
          %v259 = vld [vmem:[#allocation6] sm:$0x3]
          %260 = vst [vmem:[#allocation2] sm:$0x3] %v259
        $region56: #{tpu_custom_call.1} parent=35 // pred_fallthru
          _
        %v261 = vld [vmem:[#allocation6 + $0x2] sm:$0x3]
        %v262 = vld [vmem:[#allocation8] sm:$0xff]
        %v263 = vld [vmem:[#allocation8 + $0x8] sm:$0xff]
        %v264 = vld [vmem:[#allocation8 + $0x10] sm:$0xff]
        %v265 = vld [vmem:[#allocation8 + $0x18] sm:$0xff]
        %v266 = vld [vmem:[%s230] sm:$0x3]
        %v267 = vld [vmem:[#allocation2] sm:$0x3]
        %v268 = vld [vmem:[#allocation3] sm:$0xff]
        %v269 = vld [vmem:[#allocation3 + $0x8] sm:$0xff]
        %v270 = vld [vmem:[#allocation3 + $0x10] sm:$0xff]
        %v271 = vld [vmem:[#allocation3 + $0x18] sm:$0xff]
        %v272 = vld [vmem:[#allocation3 + $0x20] sm:$0xff]
        %v273 = vld [vmem:[#allocation3 + $0x28] sm:$0xff]
        %v274 = vld [vmem:[#allocation3 + $0x30] sm:$0xff]
        %v275 = vld [vmem:[#allocation3 + $0x38] sm:$0xff]
        %v276 = vld [vmem:[#allocation3 + $0x40] sm:$0xff]
        %v277 = vld [vmem:[#allocation3 + $0x48] sm:$0xff]
        %v278 = vld [vmem:[#allocation3 + $0x50] sm:$0xff]
        %v279 = vld [vmem:[#allocation3 + $0x58] sm:$0xff]
        %v280 = vld [vmem:[#allocation3 + $0x60] sm:$0xff]
        %v281 = vld [vmem:[#allocation3 + $0x68] sm:$0xff]
        %v282 = vld [vmem:[#allocation3 + $0x70] sm:$0xff]
        %v283 = vld [vmem:[#allocation3 + $0x78] sm:$0xff]
        %v284 = vld [vmem:[#allocation3 + $0x80] sm:$0xff]
        %v285 = vld [vmem:[#allocation3 + $0x88] sm:$0xff]
        %v286 = vld [vmem:[#allocation3 + $0x90] sm:$0xff]
        %v287 = vld [vmem:[#allocation3 + $0x98] sm:$0xff]
        %v288 = vld [vmem:[#allocation3 + $0xa0] sm:$0xff]
        %v289 = vld [vmem:[#allocation3 + $0xa8] sm:$0xff]
        %v290 = vld [vmem:[#allocation3 + $0xb0] sm:$0xff]
        %v291 = vld [vmem:[#allocation3 + $0xb8] sm:$0xff]
        %v292 = vld [vmem:[#allocation3 + $0xc0] sm:$0xff]
        %v293 = vld [vmem:[#allocation3 + $0xc8] sm:$0xff]
        %v294 = vld [vmem:[#allocation3 + $0xd0] sm:$0xff]
        %v295 = vld [vmem:[#allocation3 + $0xd8] sm:$0xff]
        %v296 = vld [vmem:[#allocation3 + $0xe0] sm:$0xff]
        %v297 = vld [vmem:[#allocation3 + $0xe8] sm:$0xff]
        %v298 = vld [vmem:[#allocation3 + $0xf0] sm:$0xff]
        %v299 = vld [vmem:[#allocation3 + $0xf8] sm:$0xff]
        %v300 = vld [vmem:[#allocation3 + $0x100] sm:$0xff]
        %v301 = vld [vmem:[#allocation3 + $0x108] sm:$0xff]
        %v302 = vld [vmem:[#allocation3 + $0x110] sm:$0xff]
        %v303 = vld [vmem:[#allocation3 + $0x118] sm:$0xff]
        %v304 = vld [vmem:[#allocation3 + $0x120] sm:$0x1f]
        %vm305 = vcmask 261120
        %v307 = vsel %vm305, %v261, 0
        %309 = vmatprep.subr.mxu0 0.0
        %310 = vmatpush1.msra.mxu0 %v272
        %311 = vmatprep.subr.mxu0 0.0
        %312 = vmatpush1.msra.mxu0 %v273
        %313 = vmatprep.subr.mxu0 0.0
        %314 = vmatpush1.msra.mxu0 %v274
        %315 = vmatprep.subr.mxu0 0.0
        %316 = vmatpush1.msra.mxu0 %v275
        %317 = vmatprep.subr.mxu0 0.0
        %318 = vmatpush1.msra.mxu0 0.0
        %319 = vmatprep.subr.mxu0 0.0
        %320 = vmatpush1.msra.mxu0 0.0
        %321 = vmatprep.subr.mxu0 0.0
        %322 = vmatpush1.msra.mxu0 0.0
        %323 = vmatprep.subr.mxu0 0.0
        %324 = vmatpush1.msra.mxu0 0.0
        %325 = vmatprep.subr.mxu0 0.0
        %326 = vmatpush1.msra.mxu0 0.0
        %327 = vmatprep.subr.mxu0 0.0
        %328 = vmatpush1.msra.mxu0 0.0
        %329 = vmatprep.subr.mxu0 0.0
        %330 = vmatpush1.msra.mxu0 0.0
        %331 = vmatprep.subr.mxu0 0.0
        %332 = vmatpush1.msra.mxu0 0.0
        %333 = vmatprep.subr.mxu0 0.0
        %334 = vmatpush1.msra.mxu0 0.0
        %335 = vmatprep.subr.mxu0 0.0
        %336 = vmatpush1.msra.mxu0 0.0
        %337 = vmatprep.subr.mxu0 0.0
        %338 = vmatpush1.msra.mxu0 0.0
        %339 = vmatprep.subr.mxu0 0.0
        %340 = vmatpush1.msra.mxu0 0.0
        %341 = vmatprep.subr.mxu0 0.0
        %342 = vmatpush1.msra.mxu0 0.0
        %343 = vmatprep.subr.mxu0 0.0
        %344 = vmatpush1.msra.mxu0 0.0
        %345 = vmatprep.subr.mxu0 0.0
        %346 = vmatpush1.msra.mxu0 0.0
        %347 = vmatprep.subr.mxu0 0.0
        %348 = vmatpush1.msra.mxu0 0.0
        %349 = vmatprep.subr.mxu0 0.0
        %350 = vmatpush1.msra.mxu0 0.0
        %351 = vmatprep.subr.mxu0 0.0
        %352 = vmatpush1.msra.mxu0 0.0
        %353 = vmatprep.subr.mxu0 0.0
        %354 = vmatpush1.msra.mxu0 0.0
        %355 = vmatprep.subr.mxu0 0.0
        %356 = vmatpush1.msra.mxu0 0.0
        %357 = vmatprep.subr.mxu0 0.0
        %358 = vmatpush1.msra.mxu0 0.0
        %359 = vmatprep.subr.mxu0 0.0
        %360 = vmatpush1.msra.mxu0 0.0
        %361 = vmatprep.subr.mxu0 0.0
        %362 = vmatpush1.msra.mxu0 0.0
        %363 = vmatprep.subr.mxu0 0.0
        %364 = vmatpush1.msra.mxu0 0.0
        %365 = vmatprep.subr.mxu0 0.0
        %366 = vmatpush1.msra.mxu0 0.0
        %367 = vmatprep.subr.mxu0 0.0
        %368 = vmatpush1.msra.mxu0 0.0
        %369 = vmatprep.subr.mxu0 0.0
        %370 = vmatpush1.msra.mxu0 0.0
        %371 = vmatprep.subr.mxu0 0.0
        %372 = vmatpush1.msra.mxu0 0.0
        %373 = vmatprep.mubr.f32.mxu0 0.0
        %374 = vmatmul.mubr.f32.gmra.mrb[0].mxu0 %v307
        %v375 = vpop.f32.mrb[0].mxu0
        %v376 = vadd.f32 0.0, %v375
        %v377 = vpop.f32.mrb[0].mxu0
        %378 = vdwg.mxu0
        %380 = vrot.lane.b32.xlu0 %v267, 96
        %v381 = vpop.permute.xlu0 %380
        %v382 = vsel %vm305, %v381, 0
        %384 = vmatprep.subr.mxu0 0.0
        %385 = vmatpush1.msra.mxu0 %v268
        %386 = vmatprep.subr.mxu0 0.0
        %387 = vmatpush1.msra.mxu0 %v269
        %388 = vmatprep.subr.mxu0 0.0
        %389 = vmatpush1.msra.mxu0 %v270
        %390 = vmatprep.subr.mxu0 0.0
        %391 = vmatpush1.msra.mxu0 %v271
        %392 = vmatprep.subr.mxu0 0.0
        %393 = vmatpush1.msra.mxu0 0.0
        %394 = vmatprep.subr.mxu0 0.0
        %395 = vmatpush1.msra.mxu0 0.0
        %396 = vmatprep.subr.mxu0 0.0
        %397 = vmatpush1.msra.mxu0 0.0
        %398 = vmatprep.subr.mxu0 0.0
        %399 = vmatpush1.msra.mxu0 0.0
        %400 = vmatprep.subr.mxu0 0.0
        %401 = vmatpush1.msra.mxu0 0.0
        %402 = vmatprep.subr.mxu0 0.0
        %403 = vmatpush1.msra.mxu0 0.0
        %404 = vmatprep.subr.mxu0 0.0
        %405 = vmatpush1.msra.mxu0 0.0
        %406 = vmatprep.subr.mxu0 0.0
        %407 = vmatpush1.msra.mxu0 0.0
        %408 = vmatprep.subr.mxu0 0.0
        %409 = vmatpush1.msra.mxu0 0.0
        %410 = vmatprep.subr.mxu0 0.0
        %411 = vmatpush1.msra.mxu0 0.0
        %412 = vmatprep.subr.mxu0 0.0
        %413 = vmatpush1.msra.mxu0 0.0
        %414 = vmatprep.subr.mxu0 0.0
        %415 = vmatpush1.msra.mxu0 0.0
        %416 = vmatprep.subr.mxu0 0.0
        %417 = vmatpush1.msra.mxu0 0.0
        %418 = vmatprep.subr.mxu0 0.0
        %419 = vmatpush1.msra.mxu0 0.0
        %420 = vmatprep.subr.mxu0 0.0
        %421 = vmatpush1.msra.mxu0 0.0
        %422 = vmatprep.subr.mxu0 0.0
        %423 = vmatpush1.msra.mxu0 0.0
        %424 = vmatprep.subr.mxu0 0.0
        %425 = vmatpush1.msra.mxu0 0.0
        %426 = vmatprep.subr.mxu0 0.0
        %427 = vmatpush1.msra.mxu0 0.0
        %428 = vmatprep.subr.mxu0 0.0
        %429 = vmatpush1.msra.mxu0 0.0
        %430 = vmatprep.subr.mxu0 0.0
        %431 = vmatpush1.msra.mxu0 0.0
        %432 = vmatprep.subr.mxu0 0.0
        %433 = vmatpush1.msra.mxu0 0.0
        %434 = vmatprep.subr.mxu0 0.0
        %435 = vmatpush1.msra.mxu0 0.0
        %436 = vmatprep.subr.mxu0 0.0
        %437 = vmatpush1.msra.mxu0 0.0
        %438 = vmatprep.subr.mxu0 0.0
        %439 = vmatpush1.msra.mxu0 0.0
        %440 = vmatprep.subr.mxu0 0.0
        %441 = vmatpush1.msra.mxu0 0.0
        %442 = vmatprep.subr.mxu0 0.0
        %443 = vmatpush1.msra.mxu0 0.0
        %444 = vmatprep.subr.mxu0 0.0
        %445 = vmatpush1.msra.mxu0 0.0
        %446 = vmatprep.subr.mxu0 0.0
        %447 = vmatpush1.msra.mxu0 0.0
        %448 = vmatprep.mubr.f32.mxu0 0.0
        %449 = vmatmul.mubr.f32.gmra.mrb[0].mxu0 %v382
        %v450 = vpop.f32.mrb[0].mxu0
        %v451 = vadd.f32 %v376, %v450
        %v452 = vpop.f32.mrb[0].mxu0
        %453 = vdwg.mxu0
        %v455 = vsel %vm305, %v266, 0
        %457 = vmatprep.subr.mxu0 0.0
        %458 = vmatpush1.msra.mxu0 %v276
        %459 = vmatprep.subr.mxu0 0.0
        %460 = vmatpush1.msra.mxu0 %v277
        %461 = vmatprep.subr.mxu0 0.0
        %462 = vmatpush1.msra.mxu0 %v278
        %463 = vmatprep.subr.mxu0 0.0
        %464 = vmatpush1.msra.mxu0 %v279
        %465 = vmatprep.subr.mxu0 0.0
        %466 = vmatpush1.msra.mxu0 0.0
        %467 = vmatprep.subr.mxu0 0.0
        %468 = vmatpush1.msra.mxu0 0.0
        %469 = vmatprep.subr.mxu0 0.0
        %470 = vmatpush1.msra.mxu0 0.0
        %471 = vmatprep.subr.mxu0 0.0
        %472 = vmatpush1.msra.mxu0 0.0
        %473 = vmatprep.subr.mxu0 0.0
        %474 = vmatpush1.msra.mxu0 0.0
        %475 = vmatprep.subr.mxu0 0.0
        %476 = vmatpush1.msra.mxu0 0.0
        %477 = vmatprep.subr.mxu0 0.0
        %478 = vmatpush1.msra.mxu0 0.0
        %479 = vmatprep.subr.mxu0 0.0
        %480 = vmatpush1.msra.mxu0 0.0
        %481 = vmatprep.subr.mxu0 0.0
        %482 = vmatpush1.msra.mxu0 0.0
        %483 = vmatprep.subr.mxu0 0.0
        %484 = vmatpush1.msra.mxu0 0.0
        %485 = vmatprep.subr.mxu0 0.0
        %486 = vmatpush1.msra.mxu0 0.0
        %487 = vmatprep.subr.mxu0 0.0
        %488 = vmatpush1.msra.mxu0 0.0
        %489 = vmatprep.subr.mxu0 0.0
        %490 = vmatpush1.msra.mxu0 0.0
        %491 = vmatprep.subr.mxu0 0.0
        %492 = vmatpush1.msra.mxu0 0.0
        %493 = vmatprep.subr.mxu0 0.0
        %494 = vmatpush1.msra.mxu0 0.0
        %495 = vmatprep.subr.mxu0 0.0
        %496 = vmatpush1.msra.mxu0 0.0
        %497 = vmatprep.subr.mxu0 0.0
        %498 = vmatpush1.msra.mxu0 0.0
        %499 = vmatprep.subr.mxu0 0.0
        %500 = vmatpush1.msra.mxu0 0.0
        %501 = vmatprep.subr.mxu0 0.0
        %502 = vmatpush1.msra.mxu0 0.0
        %503 = vmatprep.subr.mxu0 0.0
        %504 = vmatpush1.msra.mxu0 0.0
        %505 = vmatprep.subr.mxu0 0.0
        %506 = vmatpush1.msra.mxu0 0.0
        %507 = vmatprep.subr.mxu0 0.0
        %508 = vmatpush1.msra.mxu0 0.0
        %509 = vmatprep.subr.mxu0 0.0
        %510 = vmatpush1.msra.mxu0 0.0
        %511 = vmatprep.subr.mxu0 0.0
        %512 = vmatpush1.msra.mxu0 0.0
        %513 = vmatprep.subr.mxu0 0.0
        %514 = vmatpush1.msra.mxu0 0.0
        %515 = vmatprep.subr.mxu0 0.0
        %516 = vmatpush1.msra.mxu0 0.0
        %517 = vmatprep.subr.mxu0 0.0
        %518 = vmatpush1.msra.mxu0 0.0
        %519 = vmatprep.subr.mxu0 0.0
        %520 = vmatpush1.msra.mxu0 0.0
        %521 = vmatprep.mubr.f32.mxu0 0.0
        %522 = vmatmul.mubr.f32.gmra.mrb[0].mxu0 %v455
        %v523 = vpop.f32.mrb[0].mxu0
        %v524 = vadd.f32 0.0, %v523
        %v525 = vpop.f32.mrb[0].mxu0
        %526 = vdwg.mxu0
        %v527 = vadd.f32 %v451, %v524
        %v528 = vsel %vm305, %v267, 0
        %530 = vmatprep.subr.mxu0 0.0
        %531 = vmatpush1.msra.mxu0 %v280
        %532 = vmatprep.subr.mxu0 0.0
        %533 = vmatpush1.msra.mxu0 %v281
        %534 = vmatprep.subr.mxu0 0.0
        %535 = vmatpush1.msra.mxu0 %v282
        %536 = vmatprep.subr.mxu0 0.0
        %537 = vmatpush1.msra.mxu0 %v283
        %538 = vmatprep.subr.mxu0 0.0
        %539 = vmatpush1.msra.mxu0 0.0
        %540 = vmatprep.subr.mxu0 0.0
        %541 = vmatpush1.msra.mxu0 0.0
        %542 = vmatprep.subr.mxu0 0.0
        %543 = vmatpush1.msra.mxu0 0.0
        %544 = vmatprep.subr.mxu0 0.0
        %545 = vmatpush1.msra.mxu0 0.0
        %546 = vmatprep.subr.mxu0 0.0
        %547 = vmatpush1.msra.mxu0 0.0
        %548 = vmatprep.subr.mxu0 0.0
        %549 = vmatpush1.msra.mxu0 0.0
        %550 = vmatprep.subr.mxu0 0.0
        %551 = vmatpush1.msra.mxu0 0.0
        %552 = vmatprep.subr.mxu0 0.0
        %553 = vmatpush1.msra.mxu0 0.0
        %554 = vmatprep.subr.mxu0 0.0
        %555 = vmatpush1.msra.mxu0 0.0
        %556 = vmatprep.subr.mxu0 0.0
        %557 = vmatpush1.msra.mxu0 0.0
        %558 = vmatprep.subr.mxu0 0.0
        %559 = vmatpush1.msra.mxu0 0.0
        %560 = vmatprep.subr.mxu0 0.0
        %561 = vmatpush1.msra.mxu0 0.0
        %562 = vmatprep.subr.mxu0 0.0
        %563 = vmatpush1.msra.mxu0 0.0
        %564 = vmatprep.subr.mxu0 0.0
        %565 = vmatpush1.msra.mxu0 0.0
        %566 = vmatprep.subr.mxu0 0.0
        %567 = vmatpush1.msra.mxu0 0.0
        %568 = vmatprep.subr.mxu0 0.0
        %569 = vmatpush1.msra.mxu0 0.0
        %570 = vmatprep.subr.mxu0 0.0
        %571 = vmatpush1.msra.mxu0 0.0
        %572 = vmatprep.subr.mxu0 0.0
        %573 = vmatpush1.msra.mxu0 0.0
        %574 = vmatprep.subr.mxu0 0.0
        %575 = vmatpush1.msra.mxu0 0.0
        %576 = vmatprep.subr.mxu0 0.0
        %577 = vmatpush1.msra.mxu0 0.0
        %578 = vmatprep.subr.mxu0 0.0
        %579 = vmatpush1.msra.mxu0 0.0
        %580 = vmatprep.subr.mxu0 0.0
        %581 = vmatpush1.msra.mxu0 0.0
        %582 = vmatprep.subr.mxu0 0.0
        %583 = vmatpush1.msra.mxu0 0.0
        %584 = vmatprep.subr.mxu0 0.0
        %585 = vmatpush1.msra.mxu0 0.0
        %586 = vmatprep.subr.mxu0 0.0
        %587 = vmatpush1.msra.mxu0 0.0
        %588 = vmatprep.subr.mxu0 0.0
        %589 = vmatpush1.msra.mxu0 0.0
        %590 = vmatprep.subr.mxu0 0.0
        %591 = vmatpush1.msra.mxu0 0.0
        %592 = vmatprep.subr.mxu0 0.0
        %593 = vmatpush1.msra.mxu0 0.0
        %594 = vmatprep.mubr.f32.mxu0 0.0
        %595 = vmatmul.mubr.f32.gmra.mrb[0].mxu0 %v528
        %v596 = vpop.f32.mrb[0].mxu0
        %v597 = vadd.f32 0.0, %v596
        %v598 = vpop.f32.mrb[0].mxu0
        %599 = vdwg.mxu0
        %v600 = vadd.f32 %v527, %v597
        %v601 = vlaneseq
        %v602 = vshrl.u32 %v601, 7
        %v603 = vsub.s32 0, %v602
        %v604 = vrot.slane %v304, %v603
        %v605 = vadd.f32 %v600, %v604
        %v606 = vxor.u32 %v605, 2147483648
        %v607 = vmul.f32 %v606, 1.442695
        %v608 = vpow.pop %v607
        %v609 = vadd.f32 %v608, 1.0
        %v610 = vrcp.pop %v609
        %v611 = vmul.f32 1.0, %v610
        %v612 = vtanh.pop %v605
        %v614 = vmul.f32 %v611, %v381
        %616 = vrot.lane.b32.xlu0 %v612, 64
        %v617 = vpop.permute.xlu0 %616
        %v619 = vmul.f32 %v611, %v617
        %621 = vrot.lane.b32.xlu0 %v619, 32
        %v622 = vpop.permute.xlu0 %621
        %v624 = vadd.f32 %v614, %v622
        %v625 = vtanh.pop %v624
        %627 = vrot.lane.b32.xlu0 %v625, 64
        %v628 = vpop.permute.xlu0 %627
        %v630 = vmul.f32 %v611, %v628
        %v631 = vlaneseq
        %v632 = vshrl.u32 %v631, 7
        %v633 = vsub.s32 2, %v632
        %v634 = vrot.slane %v304, %v633
        %636 = vrot.lane.b32.xlu0 %v630, 32
        %v637 = vpop.permute.xlu0 %636
        %v638 = vsel %vm305, %v637, 0
        %640 = vmatprep.subr.mxu0 0.0
        %641 = vmatpush1.msra.mxu0 %v296
        %642 = vmatprep.subr.mxu0 0.0
        %643 = vmatpush1.msra.mxu0 %v297
        %644 = vmatprep.subr.mxu0 0.0
        %645 = vmatpush1.msra.mxu0 %v298
        %646 = vmatprep.subr.mxu0 0.0
        %647 = vmatpush1.msra.mxu0 %v299
        %648 = vmatprep.subr.mxu0 0.0
        %649 = vmatpush1.msra.mxu0 0.0
        %650 = vmatprep.subr.mxu0 0.0
        %651 = vmatpush1.msra.mxu0 0.0
        %652 = vmatprep.subr.mxu0 0.0
        %653 = vmatpush1.msra.mxu0 0.0
        %654 = vmatprep.subr.mxu0 0.0
        %655 = vmatpush1.msra.mxu0 0.0
        %656 = vmatprep.subr.mxu0 0.0
        %657 = vmatpush1.msra.mxu0 0.0
        %658 = vmatprep.subr.mxu0 0.0
        %659 = vmatpush1.msra.mxu0 0.0
        %660 = vmatprep.subr.mxu0 0.0
        %661 = vmatpush1.msra.mxu0 0.0
        %662 = vmatprep.subr.mxu0 0.0
        %663 = vmatpush1.msra.mxu0 0.0
        %664 = vmatprep.subr.mxu0 0.0
        %665 = vmatpush1.msra.mxu0 0.0
        %666 = vmatprep.subr.mxu0 0.0
        %667 = vmatpush1.msra.mxu0 0.0
        %668 = vmatprep.subr.mxu0 0.0
        %669 = vmatpush1.msra.mxu0 0.0
        %670 = vmatprep.subr.mxu0 0.0
        %671 = vmatpush1.msra.mxu0 0.0
        %672 = vmatprep.subr.mxu0 0.0
        %673 = vmatpush1.msra.mxu0 0.0
        %674 = vmatprep.subr.mxu0 0.0
        %675 = vmatpush1.msra.mxu0 0.0
        %676 = vmatprep.subr.mxu0 0.0
        %677 = vmatpush1.msra.mxu0 0.0
        %678 = vmatprep.subr.mxu0 0.0
        %679 = vmatpush1.msra.mxu0 0.0
        %680 = vmatprep.subr.mxu0 0.0
        %681 = vmatpush1.msra.mxu0 0.0
        %682 = vmatprep.subr.mxu0 0.0
        %683 = vmatpush1.msra.mxu0 0.0
        %684 = vmatprep.subr.mxu0 0.0
        %685 = vmatpush1.msra.mxu0 0.0
        %686 = vmatprep.subr.mxu0 0.0
        %687 = vmatpush1.msra.mxu0 0.0
        %688 = vmatprep.subr.mxu0 0.0
        %689 = vmatpush1.msra.mxu0 0.0
        %690 = vmatprep.subr.mxu0 0.0
        %691 = vmatpush1.msra.mxu0 0.0
        %692 = vmatprep.subr.mxu0 0.0
        %693 = vmatpush1.msra.mxu0 0.0
        %694 = vmatprep.subr.mxu0 0.0
        %695 = vmatpush1.msra.mxu0 0.0
        %696 = vmatprep.subr.mxu0 0.0
        %697 = vmatpush1.msra.mxu0 0.0
        %698 = vmatprep.subr.mxu0 0.0
        %699 = vmatpush1.msra.mxu0 0.0
        %700 = vmatprep.subr.mxu0 0.0
        %701 = vmatpush1.msra.mxu0 0.0
        %702 = vmatprep.subr.mxu0 0.0
        %703 = vmatpush1.msra.mxu0 0.0
        %704 = vmatprep.mubr.f32.mxu0 0.0
        %705 = vmatmul.mubr.f32.gmra.mrb[0].mxu0 %v638
        %v706 = vpop.f32.mrb[0].mxu0
        %v707 = vadd.f32 %v634, %v706
        %v708 = vpop.f32.mrb[0].mxu0
        %709 = vdwg.mxu0
        %v712 = vunpack.c.l.s4 1966171168
        %v713 = vunpack.c.0.s8 %v712
        %v714 = vlaneseq
        %v715 = vshrl.u32 %v714, 7
        %v716 = vsub.s32 %v713, %v715
        %v717 = vrot.slane %v707, %v716
        %v718 = vcombine.high %v717, %v717
        %v720 = vunpack.c.l.s4 1966171168
        %v721 = vunpack.c.0.s8 %v720
        %v722 = vlaneseq
        %v723 = vshrl.u32 %v722, 7
        %v724 = vsub.s32 %v721, %v723
        %v725 = vrot.slane %v717, %v724
        %v727 = vunpack.c.l.s4 1966171168
        %v728 = vunpack.c.0.s8 %v727
        %v729 = vlaneseq
        %v730 = vshrl.u32 %v729, 7
        %v731 = vsub.s32 %v728, %v730
        %v732 = vrot.slane %v718, %v731
        %v733 = vlaneseq
        %v734 = vshrl.u32 %v733, 7
        %v735 = vsub.s32 0, %v734
        %v736 = vrot.slane %v725, %v735
        %v737 = vlaneseq
        %v738 = vshrl.u32 %v737, 7
        %v739 = vsub.s32 0, %v738
        %v740 = vrot.slane %v732, %v739
        %745 = vrot.lane.b32.xlu0 %v262, 64
        %v746 = vpop.permute.xlu0 %745
        %747 = vrot.lane.b32.xlu0 %v264, 64
        %v748 = vpop.permute.xlu0 %747
        %v751 = vadd.f32 %v736, %v746
        %v752 = vadd.f32 %v740, %v748
        %v753 = vtanh.pop %v751
        %v754 = vtanh.pop %v752
        %v755 = vlaneseq
        %v756 = vshrl.u32 %v755, 7
        %v757 = vsub.s32 4, %v756
        %v758 = vrot.slane %v304, %v757
        %v759 = vmul.f32 %v753, %v758
        %v760 = vmul.f32 %v754, %v758
        %v761 = vsel %vm305, %v759, 0.0
        %762 = vadd.xlane.f32.xlu0 %v761
        %v763 = vpop.xlane.xlu0 %762
        %v764 = vsel %vm305, %v760, 0.0
        %765 = vadd.xlane.f32.xlu0 %v764
        %v766 = vpop.xlane.xlu0 %765
        %v769 = vlaneseq
        %v770 = vand.u32 %v769, 127
        %v771 = vlaneseq
        %v772 = vshrl.u32 %v771, 7
        %v773 = vsub.s32 %v770, %v772
        %v774 = vrot.slane %v763, %v773
        %v775 = vlaneseq
        %v776 = vshrl.u32 %v775, 7
        %v777 = vsub.s32 %v770, %v776
        %v778 = vrot.slane %v766, %v777
        %vm779 = vcmask 1041409
        %v780 = vsel %vm779, %v778, %v774
        %vm782 = vcmask 58368
        %v783 = vsel %vm782, %v780, -inf
        %784 = vmax.xlane.f32.xlu0 %v783
        %v785 = vpop.xlane.xlu0 %784
        %v787 = vlaneseq
        %v788 = vshrl.u32 %v787, 7
        %v789 = vsub.s32 0, %v788
        %v790 = vrot.slane %v785, %v789
        %v791 = vlaneseq
        %v792 = vshrl.u32 %v791, 7
        %v793 = vsub.s32 1, %v792
        %v794 = vrot.slane %v785, %v793
        %v797 = vsub.f32 %v763, %v790
        %v798 = vsub.f32 %v766, %v794
        %v799 = vmul.f32 %v797, 1.442695
        %v800 = vpow.pop %v799
        %v801 = vmul.f32 %v798, 1.442695
        %v802 = vpow.pop %v801
        %805 = vset.pattern.permute.xlu0 0
        %806 = vperm.xlu0 %805, %v800
        %v807 = vpop.permute.xlu0 %806
        %808 = vset.pattern.permute.xlu0 0
        %809 = vperm.xlu0 %808, %v802
        %v810 = vpop.permute.xlu0 %809
        %v811 = vlaneseq
        %v812 = vshrl.u32 %v811, 7
        %v813 = vsub.s32 %v770, %v812
        %v814 = vrot.slane %v807, %v813
        %v815 = vlaneseq
        %v816 = vshrl.u32 %v815, 7
        %v817 = vsub.s32 %v770, %v816
        %v818 = vrot.slane %v810, %v817
        %v819 = vsel %vm779, %v818, %v814
        %v821 = vsel %vm782, %v819, 0.0
        %822 = vadd.xlane.f32.xlu0 %v821
        %v823 = vpop.xlane.xlu0 %822
        %v825 = vlaneseq
        %v826 = vshrl.u32 %v825, 7
        %v827 = vsub.s32 0, %v826
        %v828 = vrot.slane %v823, %v827
        %v829 = vlaneseq
        %v830 = vshrl.u32 %v829, 7
        %v831 = vsub.s32 1, %v830
        %v832 = vrot.slane %v823, %v831
        %v835 = vrcp.pop %v828
        %v836 = vmul.f32 %v800, %v835
        %v837 = vrcp.pop %v832
        %v838 = vmul.f32 %v802, %v837
        %840 = vset.pattern.permute.xlu0 0
        %841 = vperm.xlu0 %840, %v836
        %v842 = vpop.permute.xlu0 %841
        %845 = vset.pattern.permute.xlu0 0
        %846 = vperm.xlu0 %845, %v838
        %v847 = vpop.permute.xlu0 %846
        %v849 = vmul.f32 %v842, %v262
        %v850 = vmul.f32 %v847, %v264
        %v851 = vsel %vm305, %v849, 0.0
        %v852 = vrot.slane %v851, 4
        %v853 = vadd.f32 %v851, %v852
        %v854 = vrot.slane %v853, 2
        %v855 = vadd.f32 %v853, %v854
        %v856 = vrot.slane %v855, 1
        %v857 = vadd.f32 %v855, %v856
        %v858 = vsel %vm305, %v850, 0.0
        %v859 = vrot.slane %v858, 4
        %v860 = vadd.f32 %v858, %v859
        %v861 = vrot.slane %v860, 2
        %v862 = vadd.f32 %v860, %v861
        %v863 = vrot.slane %v862, 1
        %v864 = vadd.f32 %v862, %v863
        %867 = vrot.lane.b32.xlu0 %v263, 32
        %v868 = vpop.permute.xlu0 %867
        %869 = vrot.lane.b32.xlu0 %v265, 32
        %v870 = vpop.permute.xlu0 %869
        %v873 = vadd.f32 %v736, %v868
        %v874 = vadd.f32 %v740, %v870
        %v875 = vtanh.pop %v873
        %v876 = vtanh.pop %v874
        %v877 = vmul.f32 %v875, %v758
        %v878 = vmul.f32 %v876, %v758
        %881 = vrot.lane.b32.xlu0 %v877, 96
        %v882 = vpop.permute.xlu0 %881
        %883 = vrot.lane.b32.xlu0 %v878, 96
        %v884 = vpop.permute.xlu0 %883
        %v887 = vsel %vm305, %v882, 0.0
        %888 = vadd.xlane.f32.xlu0 %v887
        %v889 = vpop.xlane.xlu0 %888
        %v890 = vsel %vm305, %v884, 0.0
        %891 = vadd.xlane.f32.xlu0 %v890
        %v892 = vpop.xlane.xlu0 %891
        %v895 = vlaneseq
        %v896 = vshrl.u32 %v895, 7
        %v897 = vsub.s32 %v770, %v896
        %v898 = vrot.slane %v889, %v897
        %v899 = vlaneseq
        %v900 = vshrl.u32 %v899, 7
        %v901 = vsub.s32 %v770, %v900
        %v902 = vrot.slane %v892, %v901
        %v903 = vsel %vm779, %v902, %v898
        %v905 = vsel %vm782, %v903, -inf
        %906 = vmax.xlane.f32.xlu0 %v905
        %v907 = vpop.xlane.xlu0 %906
        %v909 = vlaneseq
        %v910 = vshrl.u32 %v909, 7
        %v911 = vsub.s32 0, %v910
        %v912 = vrot.slane %v907, %v911
        %v913 = vlaneseq
        %v914 = vshrl.u32 %v913, 7
        %v915 = vsub.s32 1, %v914
        %v916 = vrot.slane %v907, %v915
        %v919 = vsub.f32 %v889, %v912
        %v920 = vsub.f32 %v892, %v916
        %v921 = vmul.f32 %v919, 1.442695
        %v922 = vpow.pop %v921
        %v923 = vmul.f32 %v920, 1.442695
        %v924 = vpow.pop %v923
        %927 = vset.pattern.permute.xlu0 0
        %928 = vperm.xlu0 %927, %v922
        %v929 = vpop.permute.xlu0 %928
        %930 = vset.pattern.permute.xlu0 0
        %931 = vperm.xlu0 %930, %v924
        %v932 = vpop.permute.xlu0 %931
        %v933 = vlaneseq
        %v934 = vshrl.u32 %v933, 7
        %v935 = vsub.s32 %v770, %v934
        %v936 = vrot.slane %v929, %v935
        %v937 = vlaneseq
        %v938 = vshrl.u32 %v937, 7
        %v939 = vsub.s32 %v770, %v938
        %v940 = vrot.slane %v932, %v939
        %v941 = vsel %vm779, %v940, %v936
        %v943 = vsel %vm782, %v941, 0.0
        %944 = vadd.xlane.f32.xlu0 %v943
        %v945 = vpop.xlane.xlu0 %944
        %v947 = vlaneseq
        %v948 = vshrl.u32 %v947, 7
        %v949 = vsub.s32 0, %v948
        %v950 = vrot.slane %v945, %v949
        %v951 = vlaneseq
        %v952 = vshrl.u32 %v951, 7
        %v953 = vsub.s32 1, %v952
        %v954 = vrot.slane %v945, %v953
        %v957 = vrcp.pop %v950
        %v958 = vmul.f32 %v922, %v957
        %v959 = vrcp.pop %v954
        %v960 = vmul.f32 %v924, %v959
        %962 = vset.pattern.permute.xlu0 0
        %963 = vperm.xlu0 %962, %v958
        %v964 = vpop.permute.xlu0 %963
        %967 = vset.pattern.permute.xlu0 0
        %968 = vperm.xlu0 %967, %v960
        %v969 = vpop.permute.xlu0 %968
        %v971 = vmul.f32 %v964, %v262
        %v972 = vmul.f32 %v969, %v264
        %vm973 = vcmask 523520
        %v974 = vsel %vm973, %v971, 0.0
        %v975 = vrot.slane %v974, 4
        %v976 = vadd.f32 %v974, %v975
        %v977 = vrot.slane %v976, 2
        %v978 = vadd.f32 %v976, %v977
        %v979 = vrot.slane %v978, 1
        %v980 = vadd.f32 %v978, %v979
        %v981 = vsel %vm973, %v972, 0.0
        %v982 = vrot.slane %v981, 4
        %v983 = vadd.f32 %v981, %v982
        %v984 = vrot.slane %v983, 2
        %v985 = vadd.f32 %v983, %v984
        %v986 = vrot.slane %v985, 1
        %v987 = vadd.f32 %v985, %v986
        %988 = vrot.lane.b32.xlu0 %v262, 32
        %v989 = vpop.permute.xlu0 %988
        %990 = vrot.lane.b32.xlu0 %v264, 32
        %v991 = vpop.permute.xlu0 %990
        %v994 = vsub.f32 %v980, %v989
        %v995 = vsub.f32 %v987, %v991
        %v996 = vlaneseq
        %v997 = vshrl.u32 %v996, 7
        %v998 = vsub.s32 3, %v997
        %v999 = vrot.slane %v304, %v998
        %v1002 = vsel %vm779, %v987, %v980
        %1003 = vrot.lane.b32.xlu0 %v1002, 96
        %v1004 = vpop.permute.xlu0 %1003
        %1009 = vrot.lane.b32.xlu0 %v300, 96
        %v1010 = vpop.permute.xlu0 %1009
        %1011 = vrot.lane.b32.xlu0 %v301, 96
        %v1012 = vpop.permute.xlu0 %1011
        %1013 = vrot.lane.b32.xlu0 %v302, 96
        %v1014 = vpop.permute.xlu0 %1013
        %1015 = vrot.lane.b32.xlu0 %v303, 96
        %v1016 = vpop.permute.xlu0 %1015
        %1022 = vrot.lane.b32.xlu0 %v999, 96
        %v1023 = vpop.permute.xlu0 %1022
        %v1025 = vsel %vm305, %v1004, 0
        %1027 = vmatprep.subr.mxu0 0.0
        %1028 = vmatpush1.msra.mxu0 %v1010
        %1029 = vmatprep.subr.mxu0 0.0
        %1030 = vmatpush1.msra.mxu0 %v1012
        %1031 = vmatprep.subr.mxu0 0.0
        %1032 = vmatpush1.msra.mxu0 %v1014
        %1033 = vmatprep.subr.mxu0 0.0
        %1034 = vmatpush1.msra.mxu0 %v1016
        %1035 = vmatprep.subr.mxu0 0.0
        %1036 = vmatpush1.msra.mxu0 0.0
        %1037 = vmatprep.subr.mxu0 0.0
        %1038 = vmatpush1.msra.mxu0 0.0
        %1039 = vmatprep.subr.mxu0 0.0
        %1040 = vmatpush1.msra.mxu0 0.0
        %1041 = vmatprep.subr.mxu0 0.0
        %1042 = vmatpush1.msra.mxu0 0.0
        %1043 = vmatprep.subr.mxu0 0.0
        %1044 = vmatpush1.msra.mxu0 0.0
        %1045 = vmatprep.subr.mxu0 0.0
        %1046 = vmatpush1.msra.mxu0 0.0
        %1047 = vmatprep.subr.mxu0 0.0
        %1048 = vmatpush1.msra.mxu0 0.0
        %1049 = vmatprep.subr.mxu0 0.0
        %1050 = vmatpush1.msra.mxu0 0.0
        %1051 = vmatprep.subr.mxu0 0.0
        %1052 = vmatpush1.msra.mxu0 0.0
        %1053 = vmatprep.subr.mxu0 0.0
        %1054 = vmatpush1.msra.mxu0 0.0
        %1055 = vmatprep.subr.mxu0 0.0
        %1056 = vmatpush1.msra.mxu0 0.0
        %1057 = vmatprep.subr.mxu0 0.0
        %1058 = vmatpush1.msra.mxu0 0.0
        %1059 = vmatprep.subr.mxu0 0.0
        %1060 = vmatpush1.msra.mxu0 0.0
        %1061 = vmatprep.subr.mxu0 0.0
        %1062 = vmatpush1.msra.mxu0 0.0
        %1063 = vmatprep.subr.mxu0 0.0
        %1064 = vmatpush1.msra.mxu0 0.0
        %1065 = vmatprep.subr.mxu0 0.0
        %1066 = vmatpush1.msra.mxu0 0.0
        %1067 = vmatprep.subr.mxu0 0.0
        %1068 = vmatpush1.msra.mxu0 0.0
        %1069 = vmatprep.subr.mxu0 0.0
        %1070 = vmatpush1.msra.mxu0 0.0
        %1071 = vmatprep.subr.mxu0 0.0
        %1072 = vmatpush1.msra.mxu0 0.0
        %1073 = vmatprep.subr.mxu0 0.0
        %1074 = vmatpush1.msra.mxu0 0.0
        %1075 = vmatprep.subr.mxu0 0.0
        %1076 = vmatpush1.msra.mxu0 0.0
        %1077 = vmatprep.subr.mxu0 0.0
        %1078 = vmatpush1.msra.mxu0 0.0
        %1079 = vmatprep.subr.mxu0 0.0
        %1080 = vmatpush1.msra.mxu0 0.0
        %1081 = vmatprep.subr.mxu0 0.0
        %1082 = vmatpush1.msra.mxu0 0.0
        %1083 = vmatprep.subr.mxu0 0.0
        %1084 = vmatpush1.msra.mxu0 0.0
        %1085 = vmatprep.subr.mxu0 0.0
        %1086 = vmatpush1.msra.mxu0 0.0
        %1087 = vmatprep.subr.mxu0 0.0
        %1088 = vmatpush1.msra.mxu0 0.0
        %1089 = vmatprep.subr.mxu0 0.0
        %1090 = vmatpush1.msra.mxu0 0.0
        %1091 = vmatprep.mubr.f32.mxu0 0.0
        %1092 = vmatmul.mubr.f32.gmra.mrb[0].mxu0 %v1025
        %v1093 = vpop.f32.mrb[0].mxu0
        %v1094 = vadd.f32 %v1023, %v1093
        %v1095 = vpop.f32.mrb[0].mxu0
        %1096 = vdwg.mxu0
        %v1099 = vunpack.c.l.s4 1966171168
        %v1100 = vunpack.c.0.s8 %v1099
        %v1101 = vlaneseq
        %v1102 = vshrl.u32 %v1101, 7
        %v1103 = vsub.s32 %v1100, %v1102
        %v1104 = vrot.slane %v1094, %v1103
        %v1105 = vcombine.high %v1104, %v1104
        %v1107 = vunpack.c.l.s4 1966171168
        %v1108 = vunpack.c.0.s8 %v1107
        %v1109 = vlaneseq
        %v1110 = vshrl.u32 %v1109, 7
        %v1111 = vsub.s32 %v1108, %v1110
        %v1112 = vrot.slane %v1104, %v1111
        %v1114 = vunpack.c.l.s4 1966171168
        %v1115 = vunpack.c.0.s8 %v1114
        %v1116 = vlaneseq
        %v1117 = vshrl.u32 %v1116, 7
        %v1118 = vsub.s32 %v1115, %v1117
        %v1119 = vrot.slane %v1105, %v1118
        %v1120 = vlaneseq
        %v1121 = vshrl.u32 %v1120, 7
        %v1122 = vsub.s32 0, %v1121
        %v1123 = vrot.slane %v1112, %v1122
        %v1124 = vlaneseq
        %v1125 = vshrl.u32 %v1124, 7
        %v1126 = vsub.s32 0, %v1125
        %v1127 = vrot.slane %v1119, %v1126
        %v1130 = vsub.f32 %v1123, %v989
        %v1131 = vsub.f32 %v1127, %v991
        %1134 = vrot.lane.b32.xlu0 %v1130, 64
        %v1135 = vpop.permute.xlu0 %1134
        %1136 = vrot.lane.b32.xlu0 %v1131, 64
        %v1137 = vpop.permute.xlu0 %1136
        %v1140 = vadd.f32 %v736, %v1135
        %v1141 = vadd.f32 %v740, %v1137
        %v1142 = vtanh.pop %v1140
        %v1143 = vtanh.pop %v1141
        %v1144 = vmul.f32 %v1142, %v758
        %v1145 = vmul.f32 %v1143, %v758
        %1148 = vrot.lane.b32.xlu0 %v1144, 64
        %v1149 = vpop.permute.xlu0 %1148
        %1150 = vrot.lane.b32.xlu0 %v1145, 64
        %v1151 = vpop.permute.xlu0 %1150
        %v1154 = vsel %vm305, %v1149, 0.0
        %1155 = vadd.xlane.f32.xlu0 %v1154
        %v1156 = vpop.xlane.xlu0 %1155
        %v1157 = vsel %vm305, %v1151, 0.0
        %1158 = vadd.xlane.f32.xlu0 %v1157
        %v1159 = vpop.xlane.xlu0 %1158
        %v1162 = vlaneseq
        %v1163 = vshrl.u32 %v1162, 7
        %v1164 = vsub.s32 %v770, %v1163
        %v1165 = vrot.slane %v1156, %v1164
        %v1166 = vlaneseq
        %v1167 = vshrl.u32 %v1166, 7
        %v1168 = vsub.s32 %v770, %v1167
        %v1169 = vrot.slane %v1159, %v1168
        %v1170 = vsel %vm779, %v1169, %v1165
        %v1172 = vsel %vm782, %v1170, -inf
        %1173 = vmax.xlane.f32.xlu0 %v1172
        %v1174 = vpop.xlane.xlu0 %1173
        %v1176 = vlaneseq
        %v1177 = vshrl.u32 %v1176, 7
        %v1178 = vsub.s32 0, %v1177
        %v1179 = vrot.slane %v1174, %v1178
        %v1180 = vlaneseq
        %v1181 = vshrl.u32 %v1180, 7
        %v1182 = vsub.s32 1, %v1181
        %v1183 = vrot.slane %v1174, %v1182
        %v1186 = vsub.f32 %v1156, %v1179
        %v1187 = vsub.f32 %v1159, %v1183
        %v1188 = vmul.f32 %v1186, 1.442695
        %v1189 = vpow.pop %v1188
        %v1190 = vmul.f32 %v1187, 1.442695
        %v1191 = vpow.pop %v1190
        %1194 = vset.pattern.permute.xlu0 0
        %1195 = vperm.xlu0 %1194, %v1189
        %v1196 = vpop.permute.xlu0 %1195
        %1197 = vset.pattern.permute.xlu0 0
        %1198 = vperm.xlu0 %1197, %v1191
        %v1199 = vpop.permute.xlu0 %1198
        %v1200 = vlaneseq
        %v1201 = vshrl.u32 %v1200, 7
        %v1202 = vsub.s32 %v770, %v1201
        %v1203 = vrot.slane %v1196, %v1202
        %v1204 = vlaneseq
        %v1205 = vshrl.u32 %v1204, 7
        %v1206 = vsub.s32 %v770, %v1205
        %v1207 = vrot.slane %v1199, %v1206
        %v1208 = vsel %vm779, %v1207, %v1203
        %v1210 = vsel %vm782, %v1208, 0.0
        %1211 = vadd.xlane.f32.xlu0 %v1210
        %v1212 = vpop.xlane.xlu0 %1211
        %v1214 = vlaneseq
        %v1215 = vshrl.u32 %v1214, 7
        %v1216 = vsub.s32 0, %v1215
        %v1217 = vrot.slane %v1212, %v1216
        %v1218 = vlaneseq
        %v1219 = vshrl.u32 %v1218, 7
        %v1220 = vsub.s32 1, %v1219
        %v1221 = vrot.slane %v1212, %v1220
        %v1224 = vrcp.pop %v1217
        %v1225 = vmul.f32 %v1189, %v1224
        %v1226 = vrcp.pop %v1221
        %v1227 = vmul.f32 %v1191, %v1226
        %1229 = vset.pattern.permute.xlu0 0
        %1230 = vperm.xlu0 %1229, %v1225
        %v1231 = vpop.permute.xlu0 %1230
        %1234 = vset.pattern.permute.xlu0 0
        %1235 = vperm.xlu0 %1234, %v1227
        %v1236 = vpop.permute.xlu0 %1235
        %v1238 = vmul.f32 %v1231, %v994
        %v1239 = vmul.f32 %v1236, %v995
        %v1240 = vsel %vm973, %v1238, 0.0
        %v1241 = vrot.slane %v1240, 4
        %v1242 = vadd.f32 %v1240, %v1241
        %v1243 = vrot.slane %v1242, 2
        %v1244 = vadd.f32 %v1242, %v1243
        %v1245 = vrot.slane %v1244, 1
        %v1246 = vadd.f32 %v1244, %v1245
        %v1247 = vsel %vm973, %v1239, 0.0
        %v1248 = vrot.slane %v1247, 4
        %v1249 = vadd.f32 %v1247, %v1248
        %v1250 = vrot.slane %v1249, 2
        %v1251 = vadd.f32 %v1249, %v1250
        %v1252 = vrot.slane %v1251, 1
        %v1253 = vadd.f32 %v1251, %v1252
        %v1256 = vsel %vm779, %v864, %v857
        %vm1260 = vcmask 1043459
        %v1261 = vsel %vm1260, %v1253, %v1246
        %1262 = vrot.lane.b32.xlu0 %v1261, 96
        %v1263 = vpop.permute.xlu0 %1262
        %v1266 = vunpack.c.l.s4 1983009808
        %v1267 = vunpack.c.0.s8 %v1266
        %v1268 = vlaneseq
        %v1269 = vshrl.u32 %v1268, 7
        %v1270 = vsub.s32 %v1267, %v1269
        %v1271 = vrot.slane %v261, %v1270
        %v1272 = vcombine.low %v1271, %v1271
        %vm1274 = vcmask 1041408
        %v1275 = vsel %vm1274, %v1256, %v1263
        %vm1276 = vcmask 1043456
        %v1277 = vsel %vm1276, %v1275, %v1272
        %1278 = vrot.lane.b32.xlu0 %v300, 64
        %v1279 = vpop.permute.xlu0 %1278
        %1280 = vrot.lane.b32.xlu0 %v301, 64
        %v1281 = vpop.permute.xlu0 %1280
        %1282 = vrot.lane.b32.xlu0 %v302, 64
        %v1283 = vpop.permute.xlu0 %1282
        %1284 = vrot.lane.b32.xlu0 %v303, 64
        %v1285 = vpop.permute.xlu0 %1284
        %1290 = vrot.lane.b32.xlu0 %v999, 64
        %v1291 = vpop.permute.xlu0 %1290
        %v1294 = vsel %vm305, %v1277, 0
        %1296 = vmatprep.subr.mxu0 0.0
        %1297 = vmatpush1.msra.mxu0 %v1279
        %1298 = vmatprep.subr.mxu0 0.0
        %1299 = vmatpush1.msra.mxu0 %v1281
        %1300 = vmatprep.subr.mxu0 0.0
        %1301 = vmatpush1.msra.mxu0 %v1283
        %1302 = vmatprep.subr.mxu0 0.0
        %1303 = vmatpush1.msra.mxu0 %v1285
        %1304 = vmatprep.subr.mxu0 0.0
        %1305 = vmatpush1.msra.mxu0 0.0
        %1306 = vmatprep.subr.mxu0 0.0
        %1307 = vmatpush1.msra.mxu0 0.0
        %1308 = vmatprep.subr.mxu0 0.0
        %1309 = vmatpush1.msra.mxu0 0.0
        %1310 = vmatprep.subr.mxu0 0.0
        %1311 = vmatpush1.msra.mxu0 0.0
        %1312 = vmatprep.subr.mxu0 0.0
        %1313 = vmatpush1.msra.mxu0 0.0
        %1314 = vmatprep.subr.mxu0 0.0
        %1315 = vmatpush1.msra.mxu0 0.0
        %1316 = vmatprep.subr.mxu0 0.0
        %1317 = vmatpush1.msra.mxu0 0.0
        %1318 = vmatprep.subr.mxu0 0.0
        %1319 = vmatpush1.msra.mxu0 0.0
        %1320 = vmatprep.subr.mxu0 0.0
        %1321 = vmatpush1.msra.mxu0 0.0
        %1322 = vmatprep.subr.mxu0 0.0
        %1323 = vmatpush1.msra.mxu0 0.0
        %1324 = vmatprep.subr.mxu0 0.0
        %1325 = vmatpush1.msra.mxu0 0.0
        %1326 = vmatprep.subr.mxu0 0.0
        %1327 = vmatpush1.msra.mxu0 0.0
        %1328 = vmatprep.subr.mxu0 0.0
        %1329 = vmatpush1.msra.mxu0 0.0
        %1330 = vmatprep.subr.mxu0 0.0
        %1331 = vmatpush1.msra.mxu0 0.0
        %1332 = vmatprep.subr.mxu0 0.0
        %1333 = vmatpush1.msra.mxu0 0.0
        %1334 = vmatprep.subr.mxu0 0.0
        %1335 = vmatpush1.msra.mxu0 0.0
        %1336 = vmatprep.subr.mxu0 0.0
        %1337 = vmatpush1.msra.mxu0 0.0
        %1338 = vmatprep.subr.mxu0 0.0
        %1339 = vmatpush1.msra.mxu0 0.0
        %1340 = vmatprep.subr.mxu0 0.0
        %1341 = vmatpush1.msra.mxu0 0.0
        %1342 = vmatprep.subr.mxu0 0.0
        %1343 = vmatpush1.msra.mxu0 0.0
        %1344 = vmatprep.subr.mxu0 0.0
        %1345 = vmatpush1.msra.mxu0 0.0
        %1346 = vmatprep.subr.mxu0 0.0
        %1347 = vmatpush1.msra.mxu0 0.0
        %1348 = vmatprep.subr.mxu0 0.0
        %1349 = vmatpush1.msra.mxu0 0.0
        %1350 = vmatprep.subr.mxu0 0.0
        %1351 = vmatpush1.msra.mxu0 0.0
        %1352 = vmatprep.subr.mxu0 0.0
        %1353 = vmatpush1.msra.mxu0 0.0
        %1354 = vmatprep.subr.mxu0 0.0
        %1355 = vmatpush1.msra.mxu0 0.0
        %1356 = vmatprep.subr.mxu0 0.0
        %1357 = vmatpush1.msra.mxu0 0.0
        %1358 = vmatprep.subr.mxu0 0.0
        %1359 = vmatpush1.msra.mxu0 0.0
        %1360 = vmatprep.mubr.f32.mxu0 0.0
        %1361 = vmatmul.mubr.f32.gmra.mrb[0].mxu0 %v1294
        %v1362 = vpop.f32.mrb[0].mxu0
        %v1363 = vadd.f32 %v1291, %v1362
        %v1364 = vpop.f32.mrb[0].mxu0
        %1365 = vdwg.mxu0
        %v1366 = vrot.slane %v707, 6
        %v1368 = vrot.slane %v707, 4
        %v1370 = vsel %vm1274, %v707, %v1366
        %v1371 = vsel %vm1276, %v1370, %v1368
        %1373 = vrot.lane.b32.xlu0 %v1363, 96
        %v1374 = vpop.permute.xlu0 %1373
        %v1376 = vadd.f32 %v1371, %v1374
        %v1377 = vtanh.pop %v1376
        %v1378 = vmul.f32 %v1377, %v758
        %1380 = vrot.lane.b32.xlu0 %v1378, 32
        %v1381 = vpop.permute.xlu0 %1380
        %vm1383 = vcmask 259072
        %v1384 = vsel %vm1383, %v1381, 0.0
        %1385 = vadd.xlane.f32.xlu0 %v1384
        %v1386 = vpop.xlane.xlu0 %1385
        %v1388 = vrot.slane %v1386, 2
        %v1390 = vmax.f32 %v1386, %v1388
        %v1391 = vrot.slane %v1386, 4
        %v1393 = vmax.f32 %v1390, %v1391
        %v1394 = vsub.f32 %v1386, %v1393
        %v1395 = vmul.f32 %v1394, 1.442695
        %v1396 = vpow.pop %v1395
        %v1398 = vrot.slane %v1393, 6
        %v1400 = vsub.f32 %v1386, %v1398
        %v1401 = vmul.f32 %v1400, 1.442695
        %v1402 = vpow.pop %v1401
        %v1403 = vrot.slane %v1393, 4
        %v1405 = vsub.f32 %v1386, %v1403
        %v1406 = vmul.f32 %v1405, 1.442695
        %v1407 = vpow.pop %v1406
        %1409 = vset.pattern.permute.xlu0 0
        %1410 = vperm.xlu0 %1409, %v1396
        %v1411 = vpop.permute.xlu0 %1410
        %v1413 = vmul.f32 %v1411, %v1256
        %1415 = vset.pattern.permute.xlu0 0
        %1416 = vperm.xlu0 %1415, %v1402
        %v1417 = vpop.permute.xlu0 %1416
        %v1419 = vmul.f32 %v1417, %v1263
        %v1421 = vrot.slane %v1419, 2
        %v1423 = vadd.f32 %v1413, %v1421
        %1425 = vset.pattern.permute.xlu0 0
        %1426 = vperm.xlu0 %1425, %v1407
        %v1427 = vpop.permute.xlu0 %1426
        %v1429 = vmul.f32 %v1427, %v1272
        %v1431 = vrot.slane %v1429, 4
        %v1433 = vadd.f32 %v1423, %v1431
        %v1434 = vrot.slane %v1402, 2
        %v1436 = vadd.f32 %v1396, %v1434
        %v1437 = vrot.slane %v1407, 4
        %v1439 = vadd.f32 %v1436, %v1437
        %1441 = vset.pattern.permute.xlu0 0
        %1442 = vperm.xlu0 %1441, %v1439
        %v1443 = vpop.permute.xlu0 %1442
        %v1445 = vrcp.pop %v1443
        %v1446 = vmul.f32 %v1433, %v1445
        %1447 = vmatprep.subr.mxu0 0.0
        %1448 = vmatpush1.msra.mxu0 %v288
        %1449 = vmatprep.subr.mxu0 0.0
        %1450 = vmatpush1.msra.mxu0 %v289
        %1451 = vmatprep.subr.mxu0 0.0
        %1452 = vmatpush1.msra.mxu0 %v290
        %1453 = vmatprep.subr.mxu0 0.0
        %1454 = vmatpush1.msra.mxu0 %v291
        %1455 = vmatprep.subr.mxu0 0.0
        %1456 = vmatpush1.msra.mxu0 0.0
        %1457 = vmatprep.subr.mxu0 0.0
        %1458 = vmatpush1.msra.mxu0 0.0
        %1459 = vmatprep.subr.mxu0 0.0
        %1460 = vmatpush1.msra.mxu0 0.0
        %1461 = vmatprep.subr.mxu0 0.0
        %1462 = vmatpush1.msra.mxu0 0.0
        %1463 = vmatprep.subr.mxu0 0.0
        %1464 = vmatpush1.msra.mxu0 0.0
        %1465 = vmatprep.subr.mxu0 0.0
        %1466 = vmatpush1.msra.mxu0 0.0
        %1467 = vmatprep.subr.mxu0 0.0
        %1468 = vmatpush1.msra.mxu0 0.0
        %1469 = vmatprep.subr.mxu0 0.0
        %1470 = vmatpush1.msra.mxu0 0.0
        %1471 = vmatprep.subr.mxu0 0.0
        %1472 = vmatpush1.msra.mxu0 0.0
        %1473 = vmatprep.subr.mxu0 0.0
        %1474 = vmatpush1.msra.mxu0 0.0
        %1475 = vmatprep.subr.mxu0 0.0
        %1476 = vmatpush1.msra.mxu0 0.0
        %1477 = vmatprep.subr.mxu0 0.0
        %1478 = vmatpush1.msra.mxu0 0.0
        %1479 = vmatprep.subr.mxu0 0.0
        %1480 = vmatpush1.msra.mxu0 0.0
        %1481 = vmatprep.subr.mxu0 0.0
        %1482 = vmatpush1.msra.mxu0 0.0
        %1483 = vmatprep.subr.mxu0 0.0
        %1484 = vmatpush1.msra.mxu0 0.0
        %1485 = vmatprep.subr.mxu0 0.0
        %1486 = vmatpush1.msra.mxu0 0.0
        %1487 = vmatprep.subr.mxu0 0.0
        %1488 = vmatpush1.msra.mxu0 0.0
        %1489 = vmatprep.subr.mxu0 0.0
        %1490 = vmatpush1.msra.mxu0 0.0
        %1491 = vmatprep.subr.mxu0 0.0
        %1492 = vmatpush1.msra.mxu0 0.0
        %1493 = vmatprep.subr.mxu0 0.0
        %1494 = vmatpush1.msra.mxu0 0.0
        %1495 = vmatprep.subr.mxu0 0.0
        %1496 = vmatpush1.msra.mxu0 0.0
        %1497 = vmatprep.subr.mxu0 0.0
        %1498 = vmatpush1.msra.mxu0 0.0
        %1499 = vmatprep.subr.mxu0 0.0
        %1500 = vmatpush1.msra.mxu0 0.0
        %1501 = vmatprep.subr.mxu0 0.0
        %1502 = vmatpush1.msra.mxu0 0.0
        %1503 = vmatprep.subr.mxu0 0.0
        %1504 = vmatpush1.msra.mxu0 0.0
        %1505 = vmatprep.subr.mxu0 0.0
        %1506 = vmatpush1.msra.mxu0 0.0
        %1507 = vmatprep.subr.mxu0 0.0
        %1508 = vmatpush1.msra.mxu0 0.0
        %1509 = vmatprep.subr.mxu0 0.0
        %1510 = vmatpush1.msra.mxu0 0.0
        %1511 = vmatprep.mubr.f32.mxu0 0.0
        %1512 = vmatmul.mubr.f32.gmra.mrb[0].mxu0 %v638
        %v1513 = vpop.f32.mrb[0].mxu0
        %v1514 = vadd.f32 0.0, %v1513
        %v1515 = vpop.f32.mrb[0].mxu0
        %1516 = vdwg.mxu0
        %v1518 = vsel %vm305, %v1446, 0
        %1520 = vmatprep.subr.mxu0 0.0
        %1521 = vmatpush1.msra.mxu0 %v284
        %1522 = vmatprep.subr.mxu0 0.0
        %1523 = vmatpush1.msra.mxu0 %v285
        %1524 = vmatprep.subr.mxu0 0.0
        %1525 = vmatpush1.msra.mxu0 %v286
        %1526 = vmatprep.subr.mxu0 0.0
        %1527 = vmatpush1.msra.mxu0 %v287
        %1528 = vmatprep.subr.mxu0 0.0
        %1529 = vmatpush1.msra.mxu0 0.0
        %1530 = vmatprep.subr.mxu0 0.0
        %1531 = vmatpush1.msra.mxu0 0.0
        %1532 = vmatprep.subr.mxu0 0.0
        %1533 = vmatpush1.msra.mxu0 0.0
        %1534 = vmatprep.subr.mxu0 0.0
        %1535 = vmatpush1.msra.mxu0 0.0
        %1536 = vmatprep.subr.mxu0 0.0
        %1537 = vmatpush1.msra.mxu0 0.0
        %1538 = vmatprep.subr.mxu0 0.0
        %1539 = vmatpush1.msra.mxu0 0.0
        %1540 = vmatprep.subr.mxu0 0.0
        %1541 = vmatpush1.msra.mxu0 0.0
        %1542 = vmatprep.subr.mxu0 0.0
        %1543 = vmatpush1.msra.mxu0 0.0
        %1544 = vmatprep.subr.mxu0 0.0
        %1545 = vmatpush1.msra.mxu0 0.0
        %1546 = vmatprep.subr.mxu0 0.0
        %1547 = vmatpush1.msra.mxu0 0.0
        %1548 = vmatprep.subr.mxu0 0.0
        %1549 = vmatpush1.msra.mxu0 0.0
        %1550 = vmatprep.subr.mxu0 0.0
        %1551 = vmatpush1.msra.mxu0 0.0
        %1552 = vmatprep.subr.mxu0 0.0
        %1553 = vmatpush1.msra.mxu0 0.0
        %1554 = vmatprep.subr.mxu0 0.0
        %1555 = vmatpush1.msra.mxu0 0.0
        %1556 = vmatprep.subr.mxu0 0.0
        %1557 = vmatpush1.msra.mxu0 0.0
        %1558 = vmatprep.subr.mxu0 0.0
        %1559 = vmatpush1.msra.mxu0 0.0
        %1560 = vmatprep.subr.mxu0 0.0
        %1561 = vmatpush1.msra.mxu0 0.0
        %1562 = vmatprep.subr.mxu0 0.0
        %1563 = vmatpush1.msra.mxu0 0.0
        %1564 = vmatprep.subr.mxu0 0.0
        %1565 = vmatpush1.msra.mxu0 0.0
        %1566 = vmatprep.subr.mxu0 0.0
        %1567 = vmatpush1.msra.mxu0 0.0
        %1568 = vmatprep.subr.mxu0 0.0
        %1569 = vmatpush1.msra.mxu0 0.0
        %1570 = vmatprep.subr.mxu0 0.0
        %1571 = vmatpush1.msra.mxu0 0.0
        %1572 = vmatprep.subr.mxu0 0.0
        %1573 = vmatpush1.msra.mxu0 0.0
        %1574 = vmatprep.subr.mxu0 0.0
        %1575 = vmatpush1.msra.mxu0 0.0
        %1576 = vmatprep.subr.mxu0 0.0
        %1577 = vmatpush1.msra.mxu0 0.0
        %1578 = vmatprep.subr.mxu0 0.0
        %1579 = vmatpush1.msra.mxu0 0.0
        %1580 = vmatprep.subr.mxu0 0.0
        %1581 = vmatpush1.msra.mxu0 0.0
        %1582 = vmatprep.subr.mxu0 0.0
        %1583 = vmatpush1.msra.mxu0 0.0
        %1584 = vmatprep.mubr.f32.mxu0 0.0
        %1585 = vmatmul.mubr.f32.gmra.mrb[0].mxu0 %v1518
        %v1586 = vpop.f32.mrb[0].mxu0
        %v1587 = vadd.f32 %v1514, %v1586
        %v1588 = vpop.f32.mrb[0].mxu0
        %1589 = vdwg.mxu0
        %1590 = vmatprep.subr.mxu0 0.0
        %1591 = vmatpush1.msra.mxu0 %v292
        %1592 = vmatprep.subr.mxu0 0.0
        %1593 = vmatpush1.msra.mxu0 %v293
        %1594 = vmatprep.subr.mxu0 0.0
        %1595 = vmatpush1.msra.mxu0 %v294
        %1596 = vmatprep.subr.mxu0 0.0
        %1597 = vmatpush1.msra.mxu0 %v295
        %1598 = vmatprep.subr.mxu0 0.0
        %1599 = vmatpush1.msra.mxu0 0.0
        %1600 = vmatprep.subr.mxu0 0.0
        %1601 = vmatpush1.msra.mxu0 0.0
        %1602 = vmatprep.subr.mxu0 0.0
        %1603 = vmatpush1.msra.mxu0 0.0
        %1604 = vmatprep.subr.mxu0 0.0
        %1605 = vmatpush1.msra.mxu0 0.0
        %1606 = vmatprep.subr.mxu0 0.0
        %1607 = vmatpush1.msra.mxu0 0.0
        %1608 = vmatprep.subr.mxu0 0.0
        %1609 = vmatpush1.msra.mxu0 0.0
        %1610 = vmatprep.subr.mxu0 0.0
        %1611 = vmatpush1.msra.mxu0 0.0
        %1612 = vmatprep.subr.mxu0 0.0
        %1613 = vmatpush1.msra.mxu0 0.0
        %1614 = vmatprep.subr.mxu0 0.0
        %1615 = vmatpush1.msra.mxu0 0.0
        %1616 = vmatprep.subr.mxu0 0.0
        %1617 = vmatpush1.msra.mxu0 0.0
        %1618 = vmatprep.subr.mxu0 0.0
        %1619 = vmatpush1.msra.mxu0 0.0
        %1620 = vmatprep.subr.mxu0 0.0
        %1621 = vmatpush1.msra.mxu0 0.0
        %1622 = vmatprep.subr.mxu0 0.0
        %1623 = vmatpush1.msra.mxu0 0.0
        %1624 = vmatprep.subr.mxu0 0.0
        %1625 = vmatpush1.msra.mxu0 0.0
        %1626 = vmatprep.subr.mxu0 0.0
        %1627 = vmatpush1.msra.mxu0 0.0
        %1628 = vmatprep.subr.mxu0 0.0
        %1629 = vmatpush1.msra.mxu0 0.0
        %1630 = vmatprep.subr.mxu0 0.0
        %1631 = vmatpush1.msra.mxu0 0.0
        %1632 = vmatprep.subr.mxu0 0.0
        %1633 = vmatpush1.msra.mxu0 0.0
        %1634 = vmatprep.subr.mxu0 0.0
        %1635 = vmatpush1.msra.mxu0 0.0
        %1636 = vmatprep.subr.mxu0 0.0
        %1637 = vmatpush1.msra.mxu0 0.0
        %1638 = vmatprep.subr.mxu0 0.0
        %1639 = vmatpush1.msra.mxu0 0.0
        %1640 = vmatprep.subr.mxu0 0.0
        %1641 = vmatpush1.msra.mxu0 0.0
        %1642 = vmatprep.subr.mxu0 0.0
        %1643 = vmatpush1.msra.mxu0 0.0
        %1644 = vmatprep.subr.mxu0 0.0
        %1645 = vmatpush1.msra.mxu0 0.0
        %1646 = vmatprep.subr.mxu0 0.0
        %1647 = vmatpush1.msra.mxu0 0.0
        %1648 = vmatprep.subr.mxu0 0.0
        %1649 = vmatpush1.msra.mxu0 0.0
        %1650 = vmatprep.subr.mxu0 0.0
        %1651 = vmatpush1.msra.mxu0 0.0
        %1652 = vmatprep.subr.mxu0 0.0
        %1653 = vmatpush1.msra.mxu0 0.0
        %1654 = vmatprep.mubr.f32.mxu0 0.0
        %1655 = vmatmul.mubr.f32.gmra.mrb[0].mxu0 %v382
        %v1656 = vpop.f32.mrb[0].mxu0
        %v1657 = vadd.f32 0.0, %v1656
        %v1658 = vpop.f32.mrb[0].mxu0
        %1659 = vdwg.mxu0
        %v1660 = vadd.f32 %v1587, %v1657
        %v1661 = vlaneseq
        %v1662 = vshrl.u32 %v1661, 7
        %v1663 = vsub.s32 1, %v1662
        %v1664 = vrot.slane %v304, %v1663
        %v1665 = vadd.f32 %v1660, %v1664
        %v1666 = vxor.u32 %v1665, 2147483648
        %v1667 = vmul.f32 %v1666, 1.442695
        %v1668 = vpow.pop %v1667
        %v1669 = vadd.f32 %v1668, 1.0
        %v1670 = vrcp.pop %v1669
        %v1671 = vmul.f32 1.0, %v1670
        %v1672 = vtanh.pop %v1665
        %1673 = vrot.lane.b32.xlu0 %v267, 64
        %v1674 = vpop.permute.xlu0 %1673
        %v1676 = vmul.f32 %v1671, %v1674
        %1678 = vrot.lane.b32.xlu0 %v1672, 64
        %v1679 = vpop.permute.xlu0 %1678
        %v1681 = vmul.f32 %v1671, %v1679
        %1683 = vrot.lane.b32.xlu0 %v1681, 32
        %v1684 = vpop.permute.xlu0 %1683
        %v1686 = vadd.f32 %v1676, %v1684
        %v1687 = vtanh.pop %v1686
        %1689 = vrot.lane.b32.xlu0 %v1687, 64
        %v1690 = vpop.permute.xlu0 %1689
        %v1692 = vmul.f32 %v1671, %v1690
        %1695 = vrot.lane.b32.xlu0 %v1692, 64
        %v1696 = vpop.permute.xlu0 %1695
        %1699 = vrot.lane.b32.xlu0 %v624, 32
        %v1700 = vpop.permute.xlu0 %1699
        %1703 = vrot.lane.b32.xlu0 %v1686, 64
        %v1704 = vpop.permute.xlu0 %1703
        %v1706 = vsel %vm305, %v637, %v1696
        %vm1707 = vcmask 523264
        %v1708 = vsel %vm1707, %v1706, %v1700
        %vm1709 = vcmask 785408
        %v1710 = vsel %vm1709, %v1708, %v1704
        %1711 = vst [vmem:[#allocation2] sm:$0x3] %v1710
        %v1713 = vcombine.low %v1710, %v1446
        %v1715 = vunpack.c.l.s4 1983009808
        %v1716 = vunpack.c.0.s8 %v1715
        %v1717 = vlaneseq
        %v1718 = vshrl.u32 %v1717, 7
        %v1719 = vsub.s32 %v1716, %v1718
        %v1720 = vrot.slane %v1713, %v1719
        %vm1722 = vcmask 257026
        %vm1723 = vmor %vm1722, %vm1274
        %1724 = vst.msk [vmem:[%s254] sm:$0xf] %vm1723, %v1720
        %s1725 = sand.u32 %s120, 1
        %s1726 = scalar_lea.sflag [#allocation5], %s1725
        %s1727 = sand.u32 %s120, 1
        %s1728 = smul.addr %s1727, 4
        %s1729 = scalar_lea.vmem [#allocation11], %s1728
        // Predicated region
        $region57: #{tpu_custom_call.1} parent=35 // pred_check
          %p1730 = pneg %p130
        $region58: #{tpu_custom_call.1} parent=35 // pred_check_branch
          %1732 = sbr.rel (%p1730) target = $region60
        $region59: #{tpu_custom_call.1} parent=35 // pred_region
          %s1734 = ssub.s32 64, 64
          %1735 = vsyncadd %s1726, %s1734
          %s1736 = smul.addr %s23, 2
          %s1737 = smul.addr %s1736, 32
          %s1738 = scalar_lea.hbm %s4, %s1737
          %s1740 = sshll.u32 %s1729, 4
          %s1741 = int_to_ptr.vmem [resolvable:$true] %s1740
          %1743 = dma.vmem_to_hbm [thread:$0]  %s1741, 64, %s1738, %s1726
        $region60: #{tpu_custom_call.1} parent=35 // pred_fallthru
          _
      $region36: #{tpu_custom_call.1} parent=5 // pred_fallthru
        _
      %p1744 = scmp.le.s32.totalorder 2, %s18
      // Predicated region
      $region61: #{tpu_custom_call.1} parent=5 // pred_check
        %p1745 = pneg %p1744
      $region62: #{tpu_custom_call.1} parent=5 // pred_check_branch
        %1747 = sbr.rel (%p1745) target = $region64
      $region63: #{tpu_custom_call.1} parent=5 // pred_region
        %s1748 = ssub.s32 %s18, 2
        // Predicated region
        $region65: #{tpu_custom_call.1} parent=63 // pred_check
          %p1749 = pneg %p136
        $region66: #{tpu_custom_call.1} parent=63 // pred_check_branch
          %1751 = sbr.rel (%p1749) target = $region68
        $region67: #{tpu_custom_call.1} parent=63 // pred_region
          %s1752 = sand.u32 %s121, 1
          %s1753 = scalar_lea.sflag [#allocation5], %s1752
          %s1754 = sand.u32 %s121, 1
          %s1755 = smul.addr %s1754, 4
          %s1756 = scalar_lea.vmem [#allocation11], %s1755
          %1757 = dma.done %s1753, 64
        $region68: #{tpu_custom_call.1} parent=63 // pred_fallthru
          _
      $region64: #{tpu_custom_call.1} parent=5 // pred_fallthru
        _
    $region6: #{tpu_custom_call.1} parent=1 // loop_footer
      %s22 = sadd.s32 1, %s18
    $region7: #{tpu_custom_call.1} parent=1 // loop_footer_branch
      %17 = sbr.rel target = $region3
    $region8: #{tpu_custom_call.1} parent=1 // loop_exit
      _
    %1758 = vsyncpa [#allocation4], 1
    %s1759 = scalar_lea.sflag [#allocation4], 1
    %1760 = vsyncpa %s1759, 1
    %1761 = vsyncpa [#allocation7], 1
    %1762 = vsyncpa [#allocation10], 1
    %s1763 = scalar_lea.sflag [#allocation10], 1
    %1764 = vsyncpa %s1763, 1
    %1765 = vsyncpa [#allocation5], 1
    %s1766 = scalar_lea.sflag [#allocation5], 1
    %1767 = vsyncpa %s1766, 1

</llo_original>
